<compile_context>
chip_gen: v5e
topology: v5e:2x2
jax: 0.10.0
libtpu: 0.0.40
codegen_flags: <defaults>
</compile_context>

<pallas_src>
import jax
import jax.numpy as jnp
import numpy as np
from jax.experimental import pallas as pl
from jax.experimental.pallas import tpu as pltpu


def _round_up(x, m):
    return (x + m - 1) // m * m


def _pick_tile(total, target, min_tile=128):
    """Largest multiple-of-min_tile divisor of `total` that is <= target."""
    best = min_tile
    t = min_tile
    while t <= total:
        if total % t == 0 and t <= target:
            best = t
        t += min_tile
    return best


# ---------------------------------------------------------------------------
# Fused kernel:
#   out[m-tile] = ReLU( ReLU( sum_k A[m-tile, k-tile] @ W[k-tile] ) @ fc )
# Grid = (m_tiles, k_tiles); k is the trailing reduction axis, accumulated in a
# per-m-tile f32 VMEM scratch; epilogue (last k) applies ReLU, the fused dense
# layer (f32), ReLU, and writes one lane-dense [tile_m, h1_pad] f32 block.
# ---------------------------------------------------------------------------
def _make_rgc_dense_kernel(resident_w, tile_k):
    def kernel(a_ref, w_ref, fc_ref, o_ref, acc_ref):
        k = pl.program_id(1)
        nk = pl.num_programs(1)

        @pl.when(k == 0)
        def _init():
            acc_ref[...] = jnp.zeros_like(acc_ref)

        if resident_w:
            # Whole W lives in VMEM; slice the current K tile (lane-aligned start).
            start = pl.multiple_of(k * tile_k, 128)
            w_blk = w_ref[pl.ds(start, tile_k), :]
        else:
            w_blk = w_ref[...]

        acc_ref[...] += jnp.dot(a_ref[...], w_blk,
                                preferred_element_type=jnp.float32)

        @pl.when(k == nk - 1)
        def _epilogue():
            feat = jnp.maximum(acc_ref[...], 0.0)          # f32, no extra downcast
            o_ref[...] = jnp.maximum(
                jnp.dot(feat, fc_ref[...], preferred_element_type=jnp.float32),
                0.0).astype(o_ref.dtype)

    return kernel


def rgc_dense_fused_pallas(adj_flat, w_flat, fc_w, *,
                           tile_m_target=1024, tile_k_target=2048):
    """adj_flat: [n_pad, K] bf16, w_flat: [K, h0_pad] bf16, fc_w: [H0, H1] f32
    -> [n_pad, h1_pad] f32 = ReLU( ReLU(adj_flat @ w_flat) @ fc_w_padded )."""
    n_pad, K = adj_flat.shape
    h0_pad = w_flat.shape[-1]
    H0, H1 = fc_w.shape
    h1_pad = _round_up(H1, 128)

    assert n_pad % 256 == 0 and K % 128 == 0 and h0_pad % 128 == 0
    assert w_flat.shape[0] == K and H0 <= h0_pad

    # Tiles: divisors of the padded sizes; guarantee m_tiles >= 2 (v7x megacore).
    tile_m = _pick_tile(n_pad, min(tile_m_target, max(n_pad // 2, 128)))
    tile_k = _pick_tile(K, tile_k_target)
    m_tiles = n_pad // tile_m
    k_tiles = K // tile_k

    fc = jnp.pad(fc_w, ((0, h0_pad - H0), (0, h1_pad - H1))).astype(jnp.float32)

    # Keep the whole W resident in VMEM when (double-buffered) it fits the budget.
    itemsize = adj_flat.dtype.itemsize
    w_resident_bytes = 2 * K * h0_pad * w_flat.dtype.itemsize
    resident_w = w_resident_bytes <= (20 << 20)

    a_block_bytes = 2 * tile_m * tile_k * itemsize
    w_block_bytes = (w_resident_bytes if resident_w
                     else 2 * tile_k * h0_pad * w_flat.dtype.itemsize)
    vmem_bytes = (a_block_bytes + w_block_bytes
                  + 2 * h0_pad * h1_pad * 4        # fc (grid-invariant)
                  + 2 * tile_m * h1_pad * 4        # output block
                  + tile_m * h0_pad * 4)           # accumulator scratch
    # Explicit scoped-VMEM limit: above v5e's 16 MiB default, below v7x's 64 MiB.
    vmem_limit = int(min(max(vmem_bytes + (8 << 20), 32 << 20), 48 << 20))

    if resident_w:
        w_spec = pl.BlockSpec((K, h0_pad), lambda m, k: (0, 0))
    else:
        w_spec = pl.BlockSpec((tile_k, h0_pad), lambda m, k: (k, 0))

    w_hbm_bytes = K * h0_pad * w_flat.dtype.itemsize * (1 if resident_w else m_tiles)
    cost = pl.CostEstimate(
        flops=2 * n_pad * K * h0_pad + 2 * n_pad * h0_pad * h1_pad,
        transcendentals=0,
        bytes_accessed=int(adj_flat.size * itemsize + w_hbm_bytes
                           + fc.size * 4 + n_pad * h1_pad * 4),
    )

    # NOTE: the main dot's RHS width is h0_pad=128 (<= 50% of the 256-wide
    # v6e/v7x MXU).  The kernel is HBM-bound, so this is accepted knowingly.
    out = pl.pallas_call(
        _make_rgc_dense_kernel(resident_w, tile_k),
        out_shape=jax.ShapeDtypeStruct((n_pad, h1_pad), jnp.float32),
        grid=(m_tiles, k_tiles),
        in_specs=[
            pl.BlockSpec((tile_m, tile_k), lambda m, k: (m, k)),   # A tile
            w_spec,                                                # W (resident/streamed)
            pl.BlockSpec((h0_pad, h1_pad), lambda m, k: (0, 0)),   # fc, grid-invariant
        ],
        out_specs=pl.BlockSpec((tile_m, h1_pad), lambda m, k: (m, 0)),
        scratch_shapes=[pltpu.VMEM((tile_m, h0_pad), jnp.float32)],
        compiler_params=pltpu.CompilerParams(
            dimension_semantics=("parallel", "arbitrary"),
            vmem_limit_bytes=vmem_limit),
        cost_estimate=cost,
    )(adj_flat, w_flat, fc)
    return out


# ---------------------------------------------------------------------------
# Wrapper glue: build padded/flattened bf16 adjacency + ordinal-cumsum weights
# directly (no intermediate f32 dense adjacency pass).
# ---------------------------------------------------------------------------
def _build_flat_inputs(x, edge_index, edge_type, edge_norm, ord_basis, *,
                       num_relations, num_nodes, n_pad, h0_pad,
                       dtype=jnp.bfloat16):
    R, N = num_relations, num_nodes
    H0 = ord_basis.shape[-1]
    src = edge_index[0].astype(jnp.int32)
    dst = edge_index[1].astype(jnp.int32)

    # A_flat[dst, r*n_pad + src] += edge_norm   (scattered pre-padded, in bf16)
    cols = edge_type.astype(jnp.int32) * n_pad + src
    adj = jnp.zeros((n_pad, R * n_pad), dtype)
    adj = adj.at[dst, cols].add(edge_norm.astype(dtype))

    # Ordinal basis weight sharing: cumulative sum over relations, rows gathered
    # by node index x (weight[edge_type*N + x_j] in the original RGCLayer).
    w_cum = jnp.cumsum(ord_basis, axis=0)                # [R, N, H0]
    w_x = w_cum[:, x, :]                                 # [R, N, H0]
    w = jnp.pad(w_x, ((0, 0), (0, n_pad - N), (0, h0_pad - H0))).astype(dtype)
    w = w.reshape(R * n_pad, h0_pad)                     # [K, h0_pad]
    return adj, w


def gc_encoder_forward(x, edge_index, edge_type, edge_norm, params, *,
                       num_users, num_relations, num_nodes):
    N = num_nodes
    H0, H1 = params["fc_w"].shape
    n_pad = _round_up(max(N, 256), 256)
    h0_pad = _round_up(H0, 128)

    adj, w = _build_flat_inputs(
        x, edge_index, edge_type, edge_norm, params["ord_basis"],
        num_relations=num_relations, num_nodes=num_nodes,
        n_pad=n_pad, h0_pad=h0_pad)

    out = rgc_dense_fused_pallas(adj, w, params["fc_w"])   # [n_pad, h1_pad] f32
    out = out[:N, :H1]

    # separate_features (accum == 'sum')
    u_features = out[:num_users]
    i_features = out[num_users:]
    return u_features, i_features


# ---------------------------------------------------------------------------
# Pure-JAX references for verification
# ---------------------------------------------------------------------------
def gc_encoder_reference(x, edge_index, edge_type, edge_norm, params, *,
                         num_users, num_relations, num_nodes,
                         match_kernel_precision=False):
    R, N = num_relations, num_nodes
    H0, H1 = params["fc_w"].shape
    fc = params["fc_w"]

    if match_kernel_precision:
        n_pad = _round_up(max(N, 256), 256)
        h0_pad = _round_up(H0, 128)
        adj, w = _build_flat_inputs(
            x, edge_index, edge_type, edge_norm, params["ord_basis"],
            num_relations=R, num_nodes=N, n_pad=n_pad, h0_pad=h0_pad)
        feats = jax.nn.relu(jnp.dot(adj.astype(jnp.float32), w.astype(jnp.float32),
                                    precision=jax.lax.Precision.HIGHEST))[:N, :H0]
    else:
        src, dst = edge_index[0], edge_index[1]
        adj = jnp.zeros((R, N, N), jnp.float32).at[edge_type, dst, src].add(edge_norm)
        w = jnp.cumsum(params["ord_basis"], axis=0)[:, x, :]
        feats = jax.nn.relu(jnp.einsum("rij,rjh->ih", adj, w,
                                       precision=jax.lax.Precision.HIGHEST))

    u = jax.nn.relu(jnp.dot(feats[:num_users], fc, precision=jax.lax.Precision.HIGHEST))
    i = jax.nn.relu(jnp.dot(feats[num_users:], fc, precision=jax.lax.Precision.HIGHEST))
    return u, i


def _run_case(seed, num_users, num_items, num_relations, hidden0, hidden1, num_edges):
    num_nodes = num_users + num_items
    key = jax.random.PRNGKey(seed)
    k_ob, k_fc, k_src, k_dst, k_type, k_norm = jax.random.split(key, 6)

    params = {
        # ord_basis: R params of shape (1, num_nodes*hidden0) -> [R, N, H0]
        "ord_basis": 0.1 * jax.random.normal(
            k_ob, (num_relations, num_nodes, hidden0), jnp.float32),
        # nn.Linear(hidden0, hidden1, bias=False) weight, stored as [in, out]
        "fc_w": 0.1 * jax.random.normal(k_fc, (hidden0, hidden1), jnp.float32),
    }

    x = jnp.arange(num_nodes, dtype=jnp.int32)
    edge_src = jax.random.randint(k_src, (num_edges,), 0, num_nodes)
    edge_dst = jax.random.randint(k_dst, (num_edges,), 0, num_nodes)
    edge_index = jnp.stack([edge_src, edge_dst], axis=0)            # [2, E]
    edge_type = jax.random.randint(k_type, (num_edges,), 0, num_relations)
    edge_norm = jax.random.uniform(k_norm, (num_edges,), jnp.float32, 0.5, 1.5)

    u_out, i_out = gc_encoder_forward(
        x, edge_index, edge_type, edge_norm, params,
        num_users=num_users, num_relations=num_relations, num_nodes=num_nodes)
    u_out = jax.block_until_ready(u_out)
    i_out = jax.block_until_ready(i_out)

    assert u_out.shape == (num_users, hidden1)
    assert i_out.shape == (num_items, hidden1)

    # (a) Matched-precision reference (same bf16 operands, f32 accumulation).
    u_m, i_m = gc_encoder_reference(
        x, edge_index, edge_type, edge_norm, params,
        num_users=num_users, num_relations=num_relations, num_nodes=num_nodes,
        match_kernel_precision=True)
    np.testing.assert_allclose(np.asarray(u_out), np.asarray(u_m), rtol=5e-3, atol=5e-3)
    np.testing.assert_allclose(np.asarray(i_out), np.asarray(i_m), rtol=5e-3, atol=5e-3)

    # (b) Full-f32 reference: looser tol accounts for bf16 input quantization.
    u_ref, i_ref = gc_encoder_reference(
        x, edge_index, edge_type, edge_norm, params,
        num_users=num_users, num_relations=num_relations, num_nodes=num_nodes)
    np.testing.assert_allclose(np.asarray(u_out), np.asarray(u_ref), rtol=2e-2, atol=2e-2)
    np.testing.assert_allclose(np.asarray(i_out), np.asarray(i_ref), rtol=2e-2, atol=2e-2)


if __name__ == "__main__":
    # Small GCMC-consistent config (single k-tile, 2 m-tiles).
    _run_case(seed=0, num_users=8, num_items=16, num_relations=5,
              hidden0=32, hidden1=16, num_edges=64)
    # Slightly larger config exercising multiple k-tiles + resident-W dynamic slice.
    _run_case(seed=1, num_users=100, num_items=200, num_relations=5,
              hidden0=32, hidden1=16, num_edges=2000)
    print("KERNEL_OK")
</pallas_src>

<mosaic_0001>
module attributes {stable_mosaic.version = 11 : i64} {
  func.func @kernel(%arg0: i32, %arg1: i32, %arg2: memref<128x1280xbf16, #tpu.memory_space<vmem>>, %arg3: memref<1280x128xbf16, #tpu.memory_space<vmem>>, %arg4: memref<128x128xf32, #tpu.memory_space<vmem>>, %arg5: memref<128x128xf32, #tpu.memory_space<vmem>>, %arg6: memref<128x128xf32, #tpu.memory_space<vmem>>) attributes {dimension_semantics = [#tpu.dimension_semantics<parallel>, #tpu.dimension_semantics<arbitrary>], iteration_bounds = array<i64: 2, 1>, scalar_prefetch = 0 : i64, scratch_operands = 1 : i64, tpu.core_type = #tpu.core_type<tc>, window_params = [{transform_indices = @transform_0, window_bounds = array<i64: 128, 1280>}, {pipeline_mode = #tpu.pipeline_mode<synchronous>, transform_indices = @transform_1, window_bounds = array<i64: 1280, 128>}, {pipeline_mode = #tpu.pipeline_mode<synchronous>, transform_indices = @transform_2, window_bounds = array<i64: 128, 128>}, {transform_indices = @transform_3, window_bounds = array<i64: 128, 128>}]} {
    %c0_i32 = arith.constant 0 : i32
    %0 = arith.cmpi eq, %arg1, %c0_i32 : i32
    %1 = arith.extui %0 : i1 to i32
    %c0_i32_0 = arith.constant 0 : i32
    %2 = arith.cmpi ne, %1, %c0_i32_0 : i32
    scf.if %2 {
      %cst_9 = arith.constant 0.000000e+00 : f32
      %15 = vector.broadcast %cst_9 : f32 to vector<128x128xf32>
      %c0_10 = arith.constant 0 : index
      %c0_11 = arith.constant 0 : index
      %16 = vector.load %arg6[%c0_10, %c0_11] : memref<128x128xf32, #tpu.memory_space<vmem>>, vector<128x128xf32>
      tpu.vector_store %arg6[%c0_10, %c0_11], %15 {strides = array<i32>} : memref<128x128xf32, #tpu.memory_space<vmem>>, vector<128x128xf32>,
    } else {
    }
    %c1280_i32 = arith.constant 1280 : i32
    %3 = arith.muli %arg1, %c1280_i32 : i32
    %4 = tpu.assume_multiple %3, 128 : i32
    %5 = arith.index_cast %4 : i32 to index
    %c0 = arith.constant 0 : index
    %6 = vector.load %arg3[%5, %c0] : memref<1280x128xbf16, #tpu.memory_space<vmem>>, vector<1280x128xbf16>
    %c0_1 = arith.constant 0 : index
    %c0_2 = arith.constant 0 : index
    %7 = vector.load %arg6[%c0_1, %c0_2] : memref<128x128xf32, #tpu.memory_space<vmem>>, vector<128x128xf32>
    %c0_3 = arith.constant 0 : index
    %c0_4 = arith.constant 0 : index
    %8 = vector.load %arg2[%c0_3, %c0_4] : memref<128x1280xbf16, #tpu.memory_space<vmem>>, vector<128x1280xbf16>
    %cst = arith.constant dense<0.000000e+00> : vector<128x128xf32>
    %9 = tpu.matmul %8, %6, %cst {dimension_numbers = #tpu.dot_dimension_numbers<[1], [0], [0], [1], [0, 0, 1, 1], [], []>} : vector<128x1280xbf16>, vector<1280x128xbf16>, vector<128x128xf32> -> vector<128x128xf32>
    %10 = arith.addf %7, %9 : vector<128x128xf32>
    %c0_5 = arith.constant 0 : index
    %c0_6 = arith.constant 0 : index
    %11 = vector.load %arg6[%c0_5, %c0_6] : memref<128x128xf32, #tpu.memory_space<vmem>>, vector<128x128xf32>
    tpu.vector_store %arg6[%c0_5, %c0_6], %10 {strides = array<i32>} : memref<128x128xf32, #tpu.memory_space<vmem>>, vector<128x128xf32>,
    %c0_i32_7 = arith.constant 0 : i32
    %12 = arith.cmpi eq, %arg1, %c0_i32_7 : i32
    %13 = arith.extui %12 : i1 to i32
    %c0_i32_8 = arith.constant 0 : i32
    %14 = arith.cmpi ne, %13, %c0_i32_8 : i32
    scf.if %14 {
      %c0_9 = arith.constant 0 : index
      %c0_10 = arith.constant 0 : index
      %15 = vector.load %arg6[%c0_9, %c0_10] : memref<128x128xf32, #tpu.memory_space<vmem>>, vector<128x128xf32>
      %cst_11 = arith.constant 0.000000e+00 : f32
      %16 = vector.broadcast %cst_11 : f32 to vector<128x128xf32>
      %17 = arith.maximumf %15, %16 : vector<128x128xf32>
      %c0_12 = arith.constant 0 : index
      %c0_13 = arith.constant 0 : index
      %18 = vector.load %arg4[%c0_12, %c0_13] : memref<128x128xf32, #tpu.memory_space<vmem>>, vector<128x128xf32>
      %cst_14 = arith.constant dense<0.000000e+00> : vector<128x128xf32>
      %19 = tpu.matmul %17, %18, %cst_14 {dimension_numbers = #tpu.dot_dimension_numbers<[1], [0], [0], [1], [0, 0, 1, 1], [], []>} : vector<128x128xf32>, vector<128x128xf32>, vector<128x128xf32> -> vector<128x128xf32>
      %cst_15 = arith.constant 0.000000e+00 : f32
      %20 = vector.broadcast %cst_15 : f32 to vector<128x128xf32>
      %21 = arith.maximumf %19, %20 : vector<128x128xf32>
      %c0_16 = arith.constant 0 : index
      %c0_17 = arith.constant 0 : index
      %22 = vector.load %arg5[%c0_16, %c0_17] : memref<128x128xf32, #tpu.memory_space<vmem>>, vector<128x128xf32>
      tpu.vector_store %arg5[%c0_16, %c0_17], %21 {strides = array<i32>} : memref<128x128xf32, #tpu.memory_space<vmem>>, vector<128x128xf32>,
    } else {
    }
    return
  }
  func.func @transform_0(%arg0: i32, %arg1: i32) -> (i32, i32) {
    %c0_i32 = arith.constant 0 : i32
    return %arg0, %arg1 : i32, i32
  }
  func.func @transform_1(%arg0: i32, %arg1: i32) -> (i32, i32) {
    %c0_i32 = arith.constant 0 : i32
    %c0_i32_0 = arith.constant 0 : i32
    %c0_i32_1 = arith.constant 0 : i32
    return %c0_i32, %c0_i32_0 : i32, i32
  }
  func.func @transform_2(%arg0: i32, %arg1: i32) -> (i32, i32) {
    %c0_i32 = arith.constant 0 : i32
    %c0_i32_0 = arith.constant 0 : i32
    %c0_i32_1 = arith.constant 0 : i32
    return %c0_i32, %c0_i32_0 : i32, i32
  }
  func.func @transform_3(%arg0: i32, %arg1: i32) -> (i32, i32) {
    %c0_i32 = arith.constant 0 : i32
    %c0_i32_0 = arith.constant 0 : i32
    return %arg0, %c0_i32 : i32, i32
  }
}

</mosaic_0001>

<llo_original>
// kernel: tpu_custom_call.1
$region0: #{tpu_custom_call.1}
  #allocation0 [shape = 'u32[]', space=smem, size = 0x4, offset = 0x4, fixed_abs, tag = 'smem constant byte address 0x4 - core index']
  #allocation1 [shape = 'u32[72,128]{1,0:T(1,128)}', space=vmem, size = 0x9000, scoped, tag = 'internal scratch']
  #allocation2 [shape = 'f32[128,128]{1,0:T(8,128)}', space=vmem, size = 0x10000, scoped, tag = 'scratch operand']
  %s0 = inlined_call_operand.hbm [shape: bf16[256,1280], index: 0, kind: input, shape index: {}]
  %s1 = inlined_call_operand.hbm [shape: bf16[1280,128], index: 1, kind: input, shape index: {}]
  %s2 = inlined_call_operand.hbm [shape: f32[128,128], index: 2, kind: input, shape index: {}]
  %s3 = inlined_call_operand.hbm [shape: f32[256,128], index: 3, kind: output, shape index: {}]
  %s4 = sld [smem:[#allocation0]]
  $region65: #{tpu_custom_call.1} parent=0
    _
  %s6 = ssub.s32 1, %s4
  %s7 = scalar_select 0, %s6, %s4
  $region1: #{tpu_custom_call.1} parent=0
    #allocation3 [shape = 'u8[655360]{0}', space=vmem, size = 0xa0000, scoped, tag = 'input window, operand 0']
    #allocation4 [shape = 's32[2]{0}', space=sflag, size = 0x8, scoped, tag = 'scoped memory for tpu_custom_call.1']
    #allocation5 [shape = 's32[2]{0}', space=sflag, size = 0x8, scoped, tag = 'scoped memory for tpu_custom_call.1']
    #allocation6 [shape = 'u8[327680]{0}', space=vmem, size = 0x50000, scoped, tag = 'input window, operand 1, single buffered']
    #allocation7 [shape = 's32[1]{0}', space=sflag, size = 0x4, scoped, tag = 'scoped memory for tpu_custom_call.1']
    #allocation8 [shape = 'u8[65536]{0}', space=vmem, size = 0x10000, scoped, tag = 'input window, operand 2, single buffered']
    #allocation9 [shape = 'u8[131072]{0}', space=vmem, size = 0x20000, scoped, tag = 'output window, operand 0']
    %8 = vsyncpa [#allocation4], 0
    %s9 = scalar_lea.sflag [#allocation4], 1
    %10 = vsyncpa %s9, 0
    %11 = vsyncpa [#allocation7], 0
    %12 = vsyncpa [#allocation5], 0
    %s13 = scalar_lea.sflag [#allocation5], 1
    %14 = vsyncpa %s13, 0
    loop: start=0, step=1, limit=4
    $region2: #{tpu_custom_call.1} parent=1 // loop_pre_header
      _
    $region3: #{tpu_custom_call.1} parent=1 // loop_header
      %s16 = sphi 0, %s20
      %p17 = scmp.ge.s32.totalorder %s16, 4
      %s23 = sphi 0, %s35
      %s24 = sphi 0, %s31
      %s25 = sphi 0, %s23
      %s26 = sphi 0, %s24
      %s27 = sphi 0, %s25
      %s28 = sphi 0, %s26
      %s40 = sphi 0, %s42
      %s43 = sphi 0, %s40
      %s44 = sphi 0, %s43
      %s60 = sphi 0, %s44
      %s64 = sphi 0, %s64
      %s66 = sphi 0, %s64
      %s67 = sphi 0, %s66
      %s81 = sphi 0, %s67
      %s85 = sphi 0, %s85
      %s87 = sphi 0, %s85
      %s88 = sphi 0, %s87
      %s102 = sphi 0, %s88
      %s108 = sphi 0, %s110
      %s111 = sphi 0, %s108
      %s112 = sphi 0, %s111
      %s128 = sphi 0, %s112
    $region4: #{tpu_custom_call.1} parent=1 // loop_header_branch
      %19 = sbr.rel (%p17) target = $region8
    $region5: #{tpu_custom_call.1} parent=1 // loop_body
      %s21 = ssub.s32 %s16, 1
      %s22 = ssub.s32 %s16, 2
      %s29 = sadd.s32 1, %s24
      %p30 = scmp.ge.s32.totalorder %s29, 1
      %s31 = scalar_select %p30, 0, %s29
      %s32 = sadd.s32 1, %s23
      %s33 = scalar_select %p30, %s32, %s23
      %p34 = scmp.ge.s32.totalorder %s33, 2
      %s35 = scalar_select %p34, 0, %s33
      %s36 = ssub.s32 %s23, %s35
      %s37 = ssub.s32 %s24, %s31
      %s38 = sor.u32 %s36, %s37
      %p39 = scmp.eq.s32.totalorder %s38, 0
      %s41 = sadd.s32 %s40, 1
      %s42 = scalar_select %p39, %s40, %s41
      %p45 = pneg %p39
      %p46 = scmp.eq.s32.totalorder %s16, 1
      %p47 = por %p45, %p46
      %p48 = scmp.ne.s32.totalorder %s40, %s43
      %p49 = scmp.eq.s32.totalorder %s16, 0
      %p50 = por %p48, %p49
      %p51 = scmp.ne.s32.totalorder %s40, %s43
      %p52 = scmp.eq.s32.totalorder %s21, 1
      %p53 = por %p51, %p52
      %p54 = scmp.ne.s32.totalorder %s43, %s44
      %p55 = scmp.eq.s32.totalorder %s21, 0
      %p56 = por %p54, %p55
      %p57 = scmp.ne.s32.totalorder %s43, %s44
      %p58 = scmp.eq.s32.totalorder %s22, 1
      %p59 = por %p57, %p58
      %p61 = scmp.ne.s32.totalorder %s44, %s60
      %p62 = scmp.eq.s32.totalorder %s22, 0
      %p63 = por %p61, %p62
      %s65 = sadd.s32 %s64, 1
      %p68 = scmp.eq.s32.totalorder %s16, 1
      %p69 = scmp.ne.s32.totalorder %s64, %s66
      %p70 = scmp.eq.s32.totalorder %s16, 0
      %p71 = por %p69, %p70
      %p72 = scmp.ne.s32.totalorder %s64, %s66
      %p73 = scmp.eq.s32.totalorder %s21, 1
      %p74 = por %p72, %p73
      %p75 = scmp.ne.s32.totalorder %s66, %s67
      %p76 = scmp.eq.s32.totalorder %s21, 0
      %p77 = por %p75, %p76
      %p78 = scmp.ne.s32.totalorder %s66, %s67
      %p79 = scmp.eq.s32.totalorder %s22, 1
      %p80 = por %p78, %p79
      %p82 = scmp.ne.s32.totalorder %s67, %s81
      %p83 = scmp.eq.s32.totalorder %s22, 0
      %p84 = por %p82, %p83
      %s86 = sadd.s32 %s85, 1
      %p89 = scmp.eq.s32.totalorder %s16, 1
      %p90 = scmp.ne.s32.totalorder %s85, %s87
      %p91 = scmp.eq.s32.totalorder %s16, 0
      %p92 = por %p90, %p91
      %p93 = scmp.ne.s32.totalorder %s85, %s87
      %p94 = scmp.eq.s32.totalorder %s21, 1
      %p95 = por %p93, %p94
      %p96 = scmp.ne.s32.totalorder %s87, %s88
      %p97 = scmp.eq.s32.totalorder %s21, 0
      %p98 = por %p96, %p97
      %p99 = scmp.ne.s32.totalorder %s87, %s88
      %p100 = scmp.eq.s32.totalorder %s22, 1
      %p101 = por %p99, %p100
      %p103 = scmp.ne.s32.totalorder %s88, %s102
      %p104 = scmp.eq.s32.totalorder %s22, 0
      %p105 = por %p103, %p104
      %s106 = ssub.s32 %s23, %s35
      %p107 = scmp.eq.s32.totalorder %s106, 0
      %s109 = sadd.s32 %s108, 1
      %s110 = scalar_select %p107, %s108, %s109
      %p113 = pneg %p107
      %p114 = scmp.eq.s32.totalorder %s16, 1
      %p115 = por %p113, %p114
      %p116 = scmp.ne.s32.totalorder %s108, %s111
      %p117 = scmp.eq.s32.totalorder %s16, 0
      %p118 = por %p116, %p117
      %p119 = scmp.ne.s32.totalorder %s108, %s111
      %p120 = scmp.eq.s32.totalorder %s21, 1
      %p121 = por %p119, %p120
      %p122 = scmp.ne.s32.totalorder %s111, %s112
      %p123 = scmp.eq.s32.totalorder %s21, 0
      %p124 = por %p122, %p123
      %p125 = scmp.ne.s32.totalorder %s111, %s112
      %p126 = scmp.eq.s32.totalorder %s22, 1
      %p127 = por %p125, %p126
      %p129 = scmp.ne.s32.totalorder %s112, %s128
      %p130 = scmp.eq.s32.totalorder %s22, 0
      %p131 = por %p129, %p130
      %p132 = scmp.le.s32.totalorder 1, %s16
      %p133 = scmp.lt.s32.totalorder %s16, 3
      %p134 = pnand %p132, %p133
      %p135 = pneg %p134
      // Predicated region
      $region9: #{tpu_custom_call.1} parent=5 // pred_check
        _
      $region10: #{tpu_custom_call.1} parent=5 // pred_check_branch
        %137 = sbr.rel (%p134) target = $region12
      $region11: #{tpu_custom_call.1} parent=5 // pred_region
        %s138 = ssub.s32 %s16, 1
        // Predicated region
        $region13: #{tpu_custom_call.1} parent=11 // pred_check
          %p139 = pneg %p77
        $region14: #{tpu_custom_call.1} parent=11 // pred_check_branch
          %141 = sbr.rel (%p139) target = $region16
        $region15: #{tpu_custom_call.1} parent=11 // pred_region
          %143 = vsyncadd [#allocation7], 0
          %s144 = sshll.u32 %s1, 4
          %s145 = int_to_ptr.hbm [resolvable:$true] %s144
          %s146 = sshll.u32 [#allocation6], 4
          %s147 = int_to_ptr.vmem [resolvable:$true] %s146
          %152 = dma.hbm_to_vmem [thread:$0]  %s145, 10240, %s147, [#allocation7], 64, 64, 4
        $region16: #{tpu_custom_call.1} parent=11 // pred_fallthru
          _
        // Predicated region
        $region17: #{tpu_custom_call.1} parent=11 // pred_check
          %p153 = pneg %p98
        $region18: #{tpu_custom_call.1} parent=11 // pred_check_branch
          %155 = sbr.rel (%p153) target = $region20
        $region19: #{tpu_custom_call.1} parent=11 // pred_region
          %157 = vsyncadd [#allocation7], 0
          %s158 = sshll.u32 %s2, 4
          %s159 = int_to_ptr.hbm [resolvable:$true] %s158
          %s160 = sshll.u32 [#allocation8], 4
          %s161 = int_to_ptr.vmem [resolvable:$true] %s160
          %166 = dma.hbm_to_vmem [thread:$0]  %s159, 2048, %s161, [#allocation7], 128, 128, 8
        $region20: #{tpu_custom_call.1} parent=11 // pred_fallthru
          _
      $region12: #{tpu_custom_call.1} parent=5 // pred_fallthru
        _
      %p167 = scmp.lt.s32.totalorder %s16, 2
      // Predicated region
      $region21: #{tpu_custom_call.1} parent=5 // pred_check
        %p168 = pneg %p167
      $region22: #{tpu_custom_call.1} parent=5 // pred_check_branch
        %170 = sbr.rel (%p168) target = $region24
      $region23: #{tpu_custom_call.1} parent=5 // pred_region
        // Predicated region
        $region25: #{tpu_custom_call.1} parent=23 // pred_check
          %p171 = pneg %p50
        $region26: #{tpu_custom_call.1} parent=23 // pred_check_branch
          %173 = sbr.rel (%p171) target = $region28
        $region27: #{tpu_custom_call.1} parent=23 // pred_region
          %s174 = sand.u32 %s40, 1
          %s175 = scalar_lea.sflag [#allocation4], %s174
          %s176 = sand.u32 %s40, 1
          %s177 = smul.addr %s176, 640
          %s178 = scalar_lea.vmem [#allocation3], %s177
          %s179 = smul.u32 16, %s23
          %s180 = smul.u32 10, %s24
          %182 = vsyncadd %s175, 0
          %s183 = smul.addr %s179, 10
          %s184 = sadd.s32 %s180, %s183
          %s185 = smul.addr %s184, 4
          %s186 = scalar_lea.hbm %s0, %s185
          %s187 = sshll.u32 %s186, 4
          %s188 = int_to_ptr.hbm [resolvable:$true] %s187
          %s189 = sshll.u32 %s178, 4
          %s190 = int_to_ptr.vmem [resolvable:$true] %s189
          %195 = dma.hbm_to_vmem [thread:$0]  %s188, 10240, %s190, %s175, 640, 640, 40
        $region28: #{tpu_custom_call.1} parent=23 // pred_fallthru
          _
      $region24: #{tpu_custom_call.1} parent=5 // pred_fallthru
        _
      %p196 = scmp.le.s32.totalorder 1, %s16
      %p197 = scmp.lt.s32.totalorder %s16, 3
      %p198 = pnand %p196, %p197
      %p199 = pneg %p198
      // Predicated region
      $region29: #{tpu_custom_call.1} parent=5 // pred_check
        _
      $region30: #{tpu_custom_call.1} parent=5 // pred_check_branch
        %201 = sbr.rel (%p198) target = $region32
      $region31: #{tpu_custom_call.1} parent=5 // pred_region
        %s202 = ssub.s32 %s16, 1
        %s203 = sand.u32 %s43, 1
        %s204 = scalar_lea.sflag [#allocation4], %s203
        %s205 = sand.u32 %s43, 1
        %s206 = smul.addr %s205, 640
        %s207 = scalar_lea.vmem [#allocation3], %s206
        // Predicated region
        $region33: #{tpu_custom_call.1} parent=31 // pred_check
          %p208 = pneg %p56
        $region34: #{tpu_custom_call.1} parent=31 // pred_check_branch
          %210 = sbr.rel (%p208) target = $region36
        $region35: #{tpu_custom_call.1} parent=31 // pred_region
          %212 = dma.done %s204, 10240
        $region36: #{tpu_custom_call.1} parent=31 // pred_fallthru
          _
        // Predicated region
        $region37: #{tpu_custom_call.1} parent=31 // pred_check
          %p213 = pneg %p77
        $region38: #{tpu_custom_call.1} parent=31 // pred_check_branch
          %215 = sbr.rel (%p213) target = $region40
        $region39: #{tpu_custom_call.1} parent=31 // pred_region
          %217 = dma.done [#allocation7], 10240
        $region40: #{tpu_custom_call.1} parent=31 // pred_fallthru
          _
        // Predicated region
        $region41: #{tpu_custom_call.1} parent=31 // pred_check
          %p218 = pneg %p98
        $region42: #{tpu_custom_call.1} parent=31 // pred_check_branch
          %220 = sbr.rel (%p218) target = $region44
        $region43: #{tpu_custom_call.1} parent=31 // pred_region
          %222 = dma.done [#allocation7], 2048
        $region44: #{tpu_custom_call.1} parent=31 // pred_fallthru
          _
        %s223 = sand.u32 %s43, 1
        %s224 = scalar_lea.sflag [#allocation4], %s223
        %s225 = sand.u32 %s43, 1
        %s226 = smul.addr %s225, 640
        %s227 = scalar_lea.vmem [#allocation3], %s226
        %p228 = pneg %p56
        %p229 = pneg %p53
        %p230 = pneg %p77
        %p231 = pneg %p74
        %p232 = pneg %p98
        %p233 = pneg %p95
        %p234 = pneg %p124
        %p235 = pneg %p121
        %s236 = sand.u32 %s111, 1
        %s237 = scalar_lea.sflag [#allocation5], %s236
        %s238 = sand.u32 %s111, 1
        %s239 = smul.addr %s238, 128
        %s240 = scalar_lea.vmem [#allocation9], %s239
        %s241 = smul.u32 16, %s25
        %s242 = smul.u32 10, %s26
        %s243 = smul.u32 16, %s25
        %p244 = scmp.eq.s32.totalorder %s26, 0
        // Predicated region
        $region45: #{tpu_custom_call.1} parent=31 // pred_check
          %p245 = pneg %p244
        $region46: #{tpu_custom_call.1} parent=31 // pred_check_branch
          %247 = sbr.rel (%p245) target = $region48
        $region47: #{tpu_custom_call.1} parent=31 // pred_region
          %248 = vst [vmem:[#allocation2] sm:$0xff] 0.0
          %249 = vst [vmem:[#allocation2 + $0x8] sm:$0xff] 0.0
          %250 = vst [vmem:[#allocation2 + $0x10] sm:$0xff] 0.0
          %251 = vst [vmem:[#allocation2 + $0x18] sm:$0xff] 0.0
          %252 = vst [vmem:[#allocation2 + $0x20] sm:$0xff] 0.0
          %253 = vst [vmem:[#allocation2 + $0x28] sm:$0xff] 0.0
          %254 = vst [vmem:[#allocation2 + $0x30] sm:$0xff] 0.0
          %255 = vst [vmem:[#allocation2 + $0x38] sm:$0xff] 0.0
          %256 = vst [vmem:[#allocation2 + $0x40] sm:$0xff] 0.0
          %257 = vst [vmem:[#allocation2 + $0x48] sm:$0xff] 0.0
          %258 = vst [vmem:[#allocation2 + $0x50] sm:$0xff] 0.0
          %259 = vst [vmem:[#allocation2 + $0x58] sm:$0xff] 0.0
          %260 = vst [vmem:[#allocation2 + $0x60] sm:$0xff] 0.0
          %261 = vst [vmem:[#allocation2 + $0x68] sm:$0xff] 0.0
          %262 = vst [vmem:[#allocation2 + $0x70] sm:$0xff] 0.0
          %263 = vst [vmem:[#allocation2 + $0x78] sm:$0xff] 0.0
        $region48: #{tpu_custom_call.1} parent=31 // pred_fallthru
          _
        %s264 = smul.u32 %s26, 1280
        %s265 = sshra.s32 %s264, 3
        %s266 = sand.u32 %s264, 7
        %s267 = smul.addr %s265, 4
        %s268 = scalar_lea.vmem [#allocation6], %s267
        %v269 = vld [vmem:[%s268] sm:$0xf]
        %v270 = vld [vmem:[%s268 + $0x4] sm:$0xf]
        %v271 = vld [vmem:[%s268 + $0x8] sm:$0xf]
        %v272 = vld [vmem:[%s268 + $0xc] sm:$0xf]
        %v273 = vld [vmem:[%s268 + $0x10] sm:$0xf]
        %v274 = vld [vmem:[%s268 + $0x14] sm:$0xf]
        %v275 = vld [vmem:[%s268 + $0x18] sm:$0xf]
        %v276 = vld [vmem:[%s268 + $0x1c] sm:$0xf]
        %v277 = vld [vmem:[%s268 + $0x20] sm:$0xf]
        %v278 = vld [vmem:[%s268 + $0x24] sm:$0xf]
        %v279 = vld [vmem:[%s268 + $0x28] sm:$0xf]
        %v280 = vld [vmem:[%s268 + $0x2c] sm:$0xf]
        %v281 = vld [vmem:[%s268 + $0x30] sm:$0xf]
        %v282 = vld [vmem:[%s268 + $0x34] sm:$0xf]
        %v283 = vld [vmem:[%s268 + $0x38] sm:$0xf]
        %v284 = vld [vmem:[%s268 + $0x3c] sm:$0xf]
        %v285 = vld [vmem:[%s268 + $0x40] sm:$0xf]
        %v286 = vld [vmem:[%s268 + $0x44] sm:$0xf]
        %v287 = vld [vmem:[%s268 + $0x48] sm:$0xf]
        %v288 = vld [vmem:[%s268 + $0x4c] sm:$0xf]
        %v289 = vld [vmem:[%s268 + $0x50] sm:$0xf]
        %v290 = vld [vmem:[%s268 + $0x54] sm:$0xf]
        %v291 = vld [vmem:[%s268 + $0x58] sm:$0xf]
        %v292 = vld [vmem:[%s268 + $0x5c] sm:$0xf]
        %v293 = vld [vmem:[%s268 + $0x60] sm:$0xf]
        %v294 = vld [vmem:[%s268 + $0x64] sm:$0xf]
        %v295 = vld [vmem:[%s268 + $0x68] sm:$0xf]
        %v296 = vld [vmem:[%s268 + $0x6c] sm:$0xf]
        %v297 = vld [vmem:[%s268 + $0x70] sm:$0xf]
        %v298 = vld [vmem:[%s268 + $0x74] sm:$0xf]
        %v299 = vld [vmem:[%s268 + $0x78] sm:$0xf]
        %v300 = vld [vmem:[%s268 + $0x7c] sm:$0xf]
        %v301 = vld [vmem:[%s268 + $0x80] sm:$0xf]
        %v302 = vld [vmem:[%s268 + $0x84] sm:$0xf]
        %v303 = vld [vmem:[%s268 + $0x88] sm:$0xf]
        %v304 = vld [vmem:[%s268 + $0x8c] sm:$0xf]
        %v305 = vld [vmem:[%s268 + $0x90] sm:$0xf]
        %v306 = vld [vmem:[%s268 + $0x94] sm:$0xf]
        %v307 = vld [vmem:[%s268 + $0x98] sm:$0xf]
        %v308 = vld [vmem:[%s268 + $0x9c] sm:$0xf]
        %v309 = vld [vmem:[%s268 + $0xa0] sm:$0xf]
        %v310 = vld [vmem:[%s268 + $0xa4] sm:$0xf]
        %v311 = vld [vmem:[%s268 + $0xa8] sm:$0xf]
        %v312 = vld [vmem:[%s268 + $0xac] sm:$0xf]
        %v313 = vld [vmem:[%s268 + $0xb0] sm:$0xf]
        %v314 = vld [vmem:[%s268 + $0xb4] sm:$0xf]
        %v315 = vld [vmem:[%s268 + $0xb8] sm:$0xf]
        %v316 = vld [vmem:[%s268 + $0xbc] sm:$0xf]
        %v317 = vld [vmem:[%s268 + $0xc0] sm:$0xf]
        %v318 = vld [vmem:[%s268 + $0xc4] sm:$0xf]
        %v319 = vld [vmem:[%s268 + $0xc8] sm:$0xf]
        %v320 = vld [vmem:[%s268 + $0xcc] sm:$0xf]
        %v321 = vld [vmem:[%s268 + $0xd0] sm:$0xf]
        %v322 = vld [vmem:[%s268 + $0xd4] sm:$0xf]
        %v323 = vld [vmem:[%s268 + $0xd8] sm:$0xf]
        %v324 = vld [vmem:[%s268 + $0xdc] sm:$0xf]
        %v325 = vld [vmem:[%s268 + $0xe0] sm:$0xf]
        %v326 = vld [vmem:[%s268 + $0xe4] sm:$0xf]
        %v327 = vld [vmem:[%s268 + $0xe8] sm:$0xf]
        %v328 = vld [vmem:[%s268 + $0xec] sm:$0xf]
        %v329 = vld [vmem:[%s268 + $0xf0] sm:$0xf]
        %v330 = vld [vmem:[%s268 + $0xf4] sm:$0xf]
        %v331 = vld [vmem:[%s268 + $0xf8] sm:$0xf]
        %v332 = vld [vmem:[%s268 + $0xfc] sm:$0xf]
        %v333 = vld [vmem:[%s268 + $0x100] sm:$0xf]
        %v334 = vld [vmem:[%s268 + $0x104] sm:$0xf]
        %v335 = vld [vmem:[%s268 + $0x108] sm:$0xf]
        %v336 = vld [vmem:[%s268 + $0x10c] sm:$0xf]
        %v337 = vld [vmem:[%s268 + $0x110] sm:$0xf]
        %v338 = vld [vmem:[%s268 + $0x114] sm:$0xf]
        %v339 = vld [vmem:[%s268 + $0x118] sm:$0xf]
        %v340 = vld [vmem:[%s268 + $0x11c] sm:$0xf]
        %v341 = vld [vmem:[%s268 + $0x120] sm:$0xf]
        %v342 = vld [vmem:[%s268 + $0x124] sm:$0xf]
        %v343 = vld [vmem:[%s268 + $0x128] sm:$0xf]
        %v344 = vld [vmem:[%s268 + $0x12c] sm:$0xf]
        %v345 = vld [vmem:[%s268 + $0x130] sm:$0xf]
        %v346 = vld [vmem:[%s268 + $0x134] sm:$0xf]
        %v347 = vld [vmem:[%s268 + $0x138] sm:$0xf]
        %v348 = vld [vmem:[%s268 + $0x13c] sm:$0xf]
        %v349 = vld [vmem:[%s268 + $0x140] sm:$0xf]
        %v350 = vld [vmem:[%s268 + $0x144] sm:$0xf]
        %v351 = vld [vmem:[%s268 + $0x148] sm:$0xf]
        %v352 = vld [vmem:[%s268 + $0x14c] sm:$0xf]
        %v353 = vld [vmem:[%s268 + $0x150] sm:$0xf]
        %v354 = vld [vmem:[%s268 + $0x154] sm:$0xf]
        %v355 = vld [vmem:[%s268 + $0x158] sm:$0xf]
        %v356 = vld [vmem:[%s268 + $0x15c] sm:$0xf]
        %v357 = vld [vmem:[%s268 + $0x160] sm:$0xf]
        %v358 = vld [vmem:[%s268 + $0x164] sm:$0xf]
        %v359 = vld [vmem:[%s268 + $0x168] sm:$0xf]
        %v360 = vld [vmem:[%s268 + $0x16c] sm:$0xf]
        %v361 = vld [vmem:[%s268 + $0x170] sm:$0xf]
        %v362 = vld [vmem:[%s268 + $0x174] sm:$0xf]
        %v363 = vld [vmem:[%s268 + $0x178] sm:$0xf]
        %v364 = vld [vmem:[%s268 + $0x17c] sm:$0xf]
        %v365 = vld [vmem:[%s268 + $0x180] sm:$0xf]
        %v366 = vld [vmem:[%s268 + $0x184] sm:$0xf]
        %v367 = vld [vmem:[%s268 + $0x188] sm:$0xf]
        %v368 = vld [vmem:[%s268 + $0x18c] sm:$0xf]
        %v369 = vld [vmem:[%s268 + $0x190] sm:$0xf]
        %v370 = vld [vmem:[%s268 + $0x194] sm:$0xf]
        %v371 = vld [vmem:[%s268 + $0x198] sm:$0xf]
        %v372 = vld [vmem:[%s268 + $0x19c] sm:$0xf]
        %v373 = vld [vmem:[%s268 + $0x1a0] sm:$0xf]
        %v374 = vld [vmem:[%s268 + $0x1a4] sm:$0xf]
        %v375 = vld [vmem:[%s268 + $0x1a8] sm:$0xf]
        %v376 = vld [vmem:[%s268 + $0x1ac] sm:$0xf]
        %v377 = vld [vmem:[%s268 + $0x1b0] sm:$0xf]
        %v378 = vld [vmem:[%s268 + $0x1b4] sm:$0xf]
        %v379 = vld [vmem:[%s268 + $0x1b8] sm:$0xf]
        %v380 = vld [vmem:[%s268 + $0x1bc] sm:$0xf]
        %v381 = vld [vmem:[%s268 + $0x1c0] sm:$0xf]
        %v382 = vld [vmem:[%s268 + $0x1c4] sm:$0xf]
        %v383 = vld [vmem:[%s268 + $0x1c8] sm:$0xf]
        %v384 = vld [vmem:[%s268 + $0x1cc] sm:$0xf]
        %v385 = vld [vmem:[%s268 + $0x1d0] sm:$0xf]
        %v386 = vld [vmem:[%s268 + $0x1d4] sm:$0xf]
        %v387 = vld [vmem:[%s268 + $0x1d8] sm:$0xf]
        %v388 = vld [vmem:[%s268 + $0x1dc] sm:$0xf]
        %v389 = vld [vmem:[%s268 + $0x1e0] sm:$0xf]
        %v390 = vld [vmem:[%s268 + $0x1e4] sm:$0xf]
        %v391 = vld [vmem:[%s268 + $0x1e8] sm:$0xf]
        %v392 = vld [vmem:[%s268 + $0x1ec] sm:$0xf]
        %v393 = vld [vmem:[%s268 + $0x1f0] sm:$0xf]
        %v394 = vld [vmem:[%s268 + $0x1f4] sm:$0xf]
        %v395 = vld [vmem:[%s268 + $0x1f8] sm:$0xf]
        %v396 = vld [vmem:[%s268 + $0x1fc] sm:$0xf]
        %v397 = vld [vmem:[%s268 + $0x200] sm:$0xf]
        %v398 = vld [vmem:[%s268 + $0x204] sm:$0xf]
        %v399 = vld [vmem:[%s268 + $0x208] sm:$0xf]
        %v400 = vld [vmem:[%s268 + $0x20c] sm:$0xf]
        %v401 = vld [vmem:[%s268 + $0x210] sm:$0xf]
        %v402 = vld [vmem:[%s268 + $0x214] sm:$0xf]
        %v403 = vld [vmem:[%s268 + $0x218] sm:$0xf]
        %v404 = vld [vmem:[%s268 + $0x21c] sm:$0xf]
        %v405 = vld [vmem:[%s268 + $0x220] sm:$0xf]
        %v406 = vld [vmem:[%s268 + $0x224] sm:$0xf]
        %v407 = vld [vmem:[%s268 + $0x228] sm:$0xf]
        %v408 = vld [vmem:[%s268 + $0x22c] sm:$0xf]
        %v409 = vld [vmem:[%s268 + $0x230] sm:$0xf]
        %v410 = vld [vmem:[%s268 + $0x234] sm:$0xf]
        %v411 = vld [vmem:[%s268 + $0x238] sm:$0xf]
        %v412 = vld [vmem:[%s268 + $0x23c] sm:$0xf]
        %v413 = vld [vmem:[%s268 + $0x240] sm:$0xf]
        %v414 = vld [vmem:[%s268 + $0x244] sm:$0xf]
        %v415 = vld [vmem:[%s268 + $0x248] sm:$0xf]
        %v416 = vld [vmem:[%s268 + $0x24c] sm:$0xf]
        %v417 = vld [vmem:[%s268 + $0x250] sm:$0xf]
        %v418 = vld [vmem:[%s268 + $0x254] sm:$0xf]
        %v419 = vld [vmem:[%s268 + $0x258] sm:$0xf]
        %v420 = vld [vmem:[%s268 + $0x25c] sm:$0xf]
        %v421 = vld [vmem:[%s268 + $0x260] sm:$0xf]
        %v422 = vld [vmem:[%s268 + $0x264] sm:$0xf]
        %v423 = vld [vmem:[%s268 + $0x268] sm:$0xf]
        %v424 = vld [vmem:[%s268 + $0x26c] sm:$0xf]
        %v425 = vld [vmem:[%s268 + $0x270] sm:$0xf]
        %v426 = vld [vmem:[%s268 + $0x274] sm:$0xf]
        %v427 = vld [vmem:[%s268 + $0x278] sm:$0xf]
        %v428 = vld [vmem:[%s268 + $0x27c] sm:$0xf]
        %v429 = vld [vmem:[#allocation2] sm:$0xff]
        %v430 = vld [vmem:[#allocation2 + $0x8] sm:$0xff]
        %v431 = vld [vmem:[#allocation2 + $0x10] sm:$0xff]
        %v432 = vld [vmem:[#allocation2 + $0x18] sm:$0xff]
        %v433 = vld [vmem:[#allocation2 + $0x20] sm:$0xff]
        %v434 = vld [vmem:[#allocation2 + $0x28] sm:$0xff]
        %v435 = vld [vmem:[#allocation2 + $0x30] sm:$0xff]
        %v436 = vld [vmem:[#allocation2 + $0x38] sm:$0xff]
        %v437 = vld [vmem:[#allocation2 + $0x40] sm:$0xff]
        %v438 = vld [vmem:[#allocation2 + $0x48] sm:$0xff]
        %v439 = vld [vmem:[#allocation2 + $0x50] sm:$0xff]
        %v440 = vld [vmem:[#allocation2 + $0x58] sm:$0xff]
        %v441 = vld [vmem:[#allocation2 + $0x60] sm:$0xff]
        %v442 = vld [vmem:[#allocation2 + $0x68] sm:$0xff]
        %v443 = vld [vmem:[#allocation2 + $0x70] sm:$0xff]
        %v444 = vld [vmem:[#allocation2 + $0x78] sm:$0xff]
        %v445 = vld [vmem:[%s207] sm:$0xff]
        %v446 = vld [vmem:[%s207 + $0x8] sm:$0xff]
        %v447 = vld [vmem:[%s207 + $0x10] sm:$0xff]
        %v448 = vld [vmem:[%s207 + $0x18] sm:$0xff]
        %v449 = vld [vmem:[%s207 + $0x20] sm:$0xff]
        %v450 = vld [vmem:[%s207 + $0x28] sm:$0xff]
        %v451 = vld [vmem:[%s207 + $0x30] sm:$0xff]
        %v452 = vld [vmem:[%s207 + $0x38] sm:$0xff]
        %v453 = vld [vmem:[%s207 + $0x40] sm:$0xff]
        %v454 = vld [vmem:[%s207 + $0x48] sm:$0xff]
        %v455 = vld [vmem:[%s207 + $0x50] sm:$0xff]
        %v456 = vld [vmem:[%s207 + $0x58] sm:$0xff]
        %v457 = vld [vmem:[%s207 + $0x60] sm:$0xff]
        %v458 = vld [vmem:[%s207 + $0x68] sm:$0xff]
        %v459 = vld [vmem:[%s207 + $0x70] sm:$0xff]
        %v460 = vld [vmem:[%s207 + $0x78] sm:$0xff]
        %v461 = vld [vmem:[%s207 + $0x80] sm:$0xff]
        %v462 = vld [vmem:[%s207 + $0x88] sm:$0xff]
        %v463 = vld [vmem:[%s207 + $0x90] sm:$0xff]
        %v464 = vld [vmem:[%s207 + $0x98] sm:$0xff]
        %v465 = vld [vmem:[%s207 + $0xa0] sm:$0xff]
        %v466 = vld [vmem:[%s207 + $0xa8] sm:$0xff]
        %v467 = vld [vmem:[%s207 + $0xb0] sm:$0xff]
        %v468 = vld [vmem:[%s207 + $0xb8] sm:$0xff]
        %v469 = vld [vmem:[%s207 + $0xc0] sm:$0xff]
        %v470 = vld [vmem:[%s207 + $0xc8] sm:$0xff]
        %v471 = vld [vmem:[%s207 + $0xd0] sm:$0xff]
        %v472 = vld [vmem:[%s207 + $0xd8] sm:$0xff]
        %v473 = vld [vmem:[%s207 + $0xe0] sm:$0xff]
        %v474 = vld [vmem:[%s207 + $0xe8] sm:$0xff]
        %v475 = vld [vmem:[%s207 + $0xf0] sm:$0xff]
        %v476 = vld [vmem:[%s207 + $0xf8] sm:$0xff]
        %v477 = vld [vmem:[%s207 + $0x100] sm:$0xff]
        %v478 = vld [vmem:[%s207 + $0x108] sm:$0xff]
        %v479 = vld [vmem:[%s207 + $0x110] sm:$0xff]
        %v480 = vld [vmem:[%s207 + $0x118] sm:$0xff]
        %v481 = vld [vmem:[%s207 + $0x120] sm:$0xff]
        %v482 = vld [vmem:[%s207 + $0x128] sm:$0xff]
        %v483 = vld [vmem:[%s207 + $0x130] sm:$0xff]
        %v484 = vld [vmem:[%s207 + $0x138] sm:$0xff]
        %v485 = vld [vmem:[%s207 + $0x140] sm:$0xff]
        %v486 = vld [vmem:[%s207 + $0x148] sm:$0xff]
        %v487 = vld [vmem:[%s207 + $0x150] sm:$0xff]
        %v488 = vld [vmem:[%s207 + $0x158] sm:$0xff]
        %v489 = vld [vmem:[%s207 + $0x160] sm:$0xff]
        %v490 = vld [vmem:[%s207 + $0x168] sm:$0xff]
        %v491 = vld [vmem:[%s207 + $0x170] sm:$0xff]
        %v492 = vld [vmem:[%s207 + $0x178] sm:$0xff]
        %v493 = vld [vmem:[%s207 + $0x180] sm:$0xff]
        %v494 = vld [vmem:[%s207 + $0x188] sm:$0xff]
        %v495 = vld [vmem:[%s207 + $0x190] sm:$0xff]
        %v496 = vld [vmem:[%s207 + $0x198] sm:$0xff]
        %v497 = vld [vmem:[%s207 + $0x1a0] sm:$0xff]
        %v498 = vld [vmem:[%s207 + $0x1a8] sm:$0xff]
        %v499 = vld [vmem:[%s207 + $0x1b0] sm:$0xff]
        %v500 = vld [vmem:[%s207 + $0x1b8] sm:$0xff]
        %v501 = vld [vmem:[%s207 + $0x1c0] sm:$0xff]
        %v502 = vld [vmem:[%s207 + $0x1c8] sm:$0xff]
        %v503 = vld [vmem:[%s207 + $0x1d0] sm:$0xff]
        %v504 = vld [vmem:[%s207 + $0x1d8] sm:$0xff]
        %v505 = vld [vmem:[%s207 + $0x1e0] sm:$0xff]
        %v506 = vld [vmem:[%s207 + $0x1e8] sm:$0xff]
        %v507 = vld [vmem:[%s207 + $0x1f0] sm:$0xff]
        %v508 = vld [vmem:[%s207 + $0x1f8] sm:$0xff]
        %v509 = vld [vmem:[%s207 + $0x200] sm:$0xff]
        %v510 = vld [vmem:[%s207 + $0x208] sm:$0xff]
        %v511 = vld [vmem:[%s207 + $0x210] sm:$0xff]
        %v512 = vld [vmem:[%s207 + $0x218] sm:$0xff]
        %v513 = vld [vmem:[%s207 + $0x220] sm:$0xff]
        %v514 = vld [vmem:[%s207 + $0x228] sm:$0xff]
        %v515 = vld [vmem:[%s207 + $0x230] sm:$0xff]
        %v516 = vld [vmem:[%s207 + $0x238] sm:$0xff]
        %v517 = vld [vmem:[%s207 + $0x240] sm:$0xff]
        %v518 = vld [vmem:[%s207 + $0x248] sm:$0xff]
        %v519 = vld [vmem:[%s207 + $0x250] sm:$0xff]
        %v520 = vld [vmem:[%s207 + $0x258] sm:$0xff]
        %v521 = vld [vmem:[%s207 + $0x260] sm:$0xff]
        %v522 = vld [vmem:[%s207 + $0x268] sm:$0xff]
        %v523 = vld [vmem:[%s207 + $0x270] sm:$0xff]
        %v524 = vld [vmem:[%s207 + $0x278] sm:$0xff]
        %v605 = vunpack.c.l.b16 %v445
        %v606 = vunpack.c.h.b16 %v445
        %v607 = vunpack.c.l.b16 %v446
        %v608 = vunpack.c.h.b16 %v446
        %v609 = vunpack.c.l.b16 %v447
        %v610 = vunpack.c.h.b16 %v447
        %v611 = vunpack.c.l.b16 %v448
        %v612 = vunpack.c.h.b16 %v448
        %v613 = vunpack.c.l.b16 %v449
        %v614 = vunpack.c.h.b16 %v449
        %v615 = vunpack.c.l.b16 %v450
        %v616 = vunpack.c.h.b16 %v450
        %v617 = vunpack.c.l.b16 %v451
        %v618 = vunpack.c.h.b16 %v451
        %v619 = vunpack.c.l.b16 %v452
        %v620 = vunpack.c.h.b16 %v452
        %v621 = vunpack.c.l.b16 %v453
        %v622 = vunpack.c.h.b16 %v453
        %v623 = vunpack.c.l.b16 %v454
        %v624 = vunpack.c.h.b16 %v454
        %v625 = vunpack.c.l.b16 %v455
        %v626 = vunpack.c.h.b16 %v455
        %v627 = vunpack.c.l.b16 %v456
        %v628 = vunpack.c.h.b16 %v456
        %v629 = vunpack.c.l.b16 %v457
        %v630 = vunpack.c.h.b16 %v457
        %v631 = vunpack.c.l.b16 %v458
        %v632 = vunpack.c.h.b16 %v458
        %v633 = vunpack.c.l.b16 %v459
        %v634 = vunpack.c.h.b16 %v459
        %v635 = vunpack.c.l.b16 %v460
        %v636 = vunpack.c.h.b16 %v460
        %v637 = vunpack.c.l.b16 %v461
        %v638 = vunpack.c.h.b16 %v461
        %v639 = vunpack.c.l.b16 %v462
        %v640 = vunpack.c.h.b16 %v462
        %v641 = vunpack.c.l.b16 %v463
        %v642 = vunpack.c.h.b16 %v463
        %v643 = vunpack.c.l.b16 %v464
        %v644 = vunpack.c.h.b16 %v464
        %v645 = vunpack.c.l.b16 %v465
        %v646 = vunpack.c.h.b16 %v465
        %v647 = vunpack.c.l.b16 %v466
        %v648 = vunpack.c.h.b16 %v466
        %v649 = vunpack.c.l.b16 %v467
        %v650 = vunpack.c.h.b16 %v467
        %v651 = vunpack.c.l.b16 %v468
        %v652 = vunpack.c.h.b16 %v468
        %v653 = vunpack.c.l.b16 %v469
        %v654 = vunpack.c.h.b16 %v469
        %v655 = vunpack.c.l.b16 %v470
        %v656 = vunpack.c.h.b16 %v470
        %v657 = vunpack.c.l.b16 %v471
        %v658 = vunpack.c.h.b16 %v471
        %v659 = vunpack.c.l.b16 %v472
        %v660 = vunpack.c.h.b16 %v472
        %v661 = vunpack.c.l.b16 %v473
        %v662 = vunpack.c.h.b16 %v473
        %v663 = vunpack.c.l.b16 %v474
        %v664 = vunpack.c.h.b16 %v474
        %v665 = vunpack.c.l.b16 %v475
        %v666 = vunpack.c.h.b16 %v475
        %v667 = vunpack.c.l.b16 %v476
        %v668 = vunpack.c.h.b16 %v476
        %v669 = vunpack.c.l.b16 %v477
        %v670 = vunpack.c.h.b16 %v477
        %v671 = vunpack.c.l.b16 %v478
        %v672 = vunpack.c.h.b16 %v478
        %v673 = vunpack.c.l.b16 %v479
        %v674 = vunpack.c.h.b16 %v479
        %v675 = vunpack.c.l.b16 %v480
        %v676 = vunpack.c.h.b16 %v480
        %v677 = vunpack.c.l.b16 %v481
        %v678 = vunpack.c.h.b16 %v481
        %v679 = vunpack.c.l.b16 %v482
        %v680 = vunpack.c.h.b16 %v482
        %v681 = vunpack.c.l.b16 %v483
        %v682 = vunpack.c.h.b16 %v483
        %v683 = vunpack.c.l.b16 %v484
        %v684 = vunpack.c.h.b16 %v484
        %v685 = vunpack.c.l.b16 %v485
        %v686 = vunpack.c.h.b16 %v485
        %v687 = vunpack.c.l.b16 %v486
        %v688 = vunpack.c.h.b16 %v486
        %v689 = vunpack.c.l.b16 %v487
        %v690 = vunpack.c.h.b16 %v487
        %v691 = vunpack.c.l.b16 %v488
        %v692 = vunpack.c.h.b16 %v488
        %v693 = vunpack.c.l.b16 %v489
        %v694 = vunpack.c.h.b16 %v489
        %v695 = vunpack.c.l.b16 %v490
        %v696 = vunpack.c.h.b16 %v490
        %v697 = vunpack.c.l.b16 %v491
        %v698 = vunpack.c.h.b16 %v491
        %v699 = vunpack.c.l.b16 %v492
        %v700 = vunpack.c.h.b16 %v492
        %v701 = vunpack.c.l.b16 %v493
        %v702 = vunpack.c.h.b16 %v493
        %v703 = vunpack.c.l.b16 %v494
        %v704 = vunpack.c.h.b16 %v494
        %v705 = vunpack.c.l.b16 %v495
        %v706 = vunpack.c.h.b16 %v495
        %v707 = vunpack.c.l.b16 %v496
        %v708 = vunpack.c.h.b16 %v496
        %v709 = vunpack.c.l.b16 %v497
        %v710 = vunpack.c.h.b16 %v497
        %v711 = vunpack.c.l.b16 %v498
        %v712 = vunpack.c.h.b16 %v498
        %v713 = vunpack.c.l.b16 %v499
        %v714 = vunpack.c.h.b16 %v499
        %v715 = vunpack.c.l.b16 %v500
        %v716 = vunpack.c.h.b16 %v500
        %v717 = vunpack.c.l.b16 %v501
        %v718 = vunpack.c.h.b16 %v501
        %v719 = vunpack.c.l.b16 %v502
        %v720 = vunpack.c.h.b16 %v502
        %v721 = vunpack.c.l.b16 %v503
        %v722 = vunpack.c.h.b16 %v503
        %v723 = vunpack.c.l.b16 %v504
        %v724 = vunpack.c.h.b16 %v504
        %v725 = vunpack.c.l.b16 %v505
        %v726 = vunpack.c.h.b16 %v505
        %v727 = vunpack.c.l.b16 %v506
        %v728 = vunpack.c.h.b16 %v506
        %v729 = vunpack.c.l.b16 %v507
        %v730 = vunpack.c.h.b16 %v507
        %v731 = vunpack.c.l.b16 %v508
        %v732 = vunpack.c.h.b16 %v508
        %v733 = vunpack.c.l.b16 %v509
        %v734 = vunpack.c.h.b16 %v509
        %v735 = vunpack.c.l.b16 %v510
        %v736 = vunpack.c.h.b16 %v510
        %v737 = vunpack.c.l.b16 %v511
        %v738 = vunpack.c.h.b16 %v511
        %v739 = vunpack.c.l.b16 %v512
        %v740 = vunpack.c.h.b16 %v512
        %v741 = vunpack.c.l.b16 %v513
        %v742 = vunpack.c.h.b16 %v513
        %v743 = vunpack.c.l.b16 %v514
        %v744 = vunpack.c.h.b16 %v514
        %v745 = vunpack.c.l.b16 %v515
        %v746 = vunpack.c.h.b16 %v515
        %v747 = vunpack.c.l.b16 %v516
        %v748 = vunpack.c.h.b16 %v516
        %v749 = vunpack.c.l.b16 %v517
        %v750 = vunpack.c.h.b16 %v517
        %v751 = vunpack.c.l.b16 %v518
        %v752 = vunpack.c.h.b16 %v518
        %v753 = vunpack.c.l.b16 %v519
        %v754 = vunpack.c.h.b16 %v519
        %v755 = vunpack.c.l.b16 %v520
        %v756 = vunpack.c.h.b16 %v520
        %v757 = vunpack.c.l.b16 %v521
        %v758 = vunpack.c.h.b16 %v521
        %v759 = vunpack.c.l.b16 %v522
        %v760 = vunpack.c.h.b16 %v522
        %v761 = vunpack.c.l.b16 %v523
        %v762 = vunpack.c.h.b16 %v523
        %v763 = vunpack.c.l.b16 %v524
        %v764 = vunpack.c.h.b16 %v524
        %v765 = vpack.c.b16 %v615, %v605
        %v766 = vpack.c.b16 %v616, %v606
        %v767 = vpack.c.b16 %v617, %v607
        %v768 = vpack.c.b16 %v618, %v608
        %v769 = vpack.c.b16 %v619, %v609
        %v770 = vpack.c.b16 %v620, %v610
        %v771 = vpack.c.b16 %v621, %v611
        %v772 = vpack.c.b16 %v622, %v612
        %v773 = vpack.c.b16 %v623, %v613
        %v774 = vpack.c.b16 %v624, %v614
        %v775 = vpack.c.b16 %v635, %v625
        %v776 = vpack.c.b16 %v636, %v626
        %v777 = vpack.c.b16 %v637, %v627
        %v778 = vpack.c.b16 %v638, %v628
        %v779 = vpack.c.b16 %v639, %v629
        %v780 = vpack.c.b16 %v640, %v630
        %v781 = vpack.c.b16 %v641, %v631
        %v782 = vpack.c.b16 %v642, %v632
        %v783 = vpack.c.b16 %v643, %v633
        %v784 = vpack.c.b16 %v644, %v634
        %v785 = vpack.c.b16 %v655, %v645
        %v786 = vpack.c.b16 %v656, %v646
        %v787 = vpack.c.b16 %v657, %v647
        %v788 = vpack.c.b16 %v658, %v648
        %v789 = vpack.c.b16 %v659, %v649
        %v790 = vpack.c.b16 %v660, %v650
        %v791 = vpack.c.b16 %v661, %v651
        %v792 = vpack.c.b16 %v662, %v652
        %v793 = vpack.c.b16 %v663, %v653
        %v794 = vpack.c.b16 %v664, %v654
        %v795 = vpack.c.b16 %v675, %v665
        %v796 = vpack.c.b16 %v676, %v666
        %v797 = vpack.c.b16 %v677, %v667
        %v798 = vpack.c.b16 %v678, %v668
        %v799 = vpack.c.b16 %v679, %v669
        %v800 = vpack.c.b16 %v680, %v670
        %v801 = vpack.c.b16 %v681, %v671
        %v802 = vpack.c.b16 %v682, %v672
        %v803 = vpack.c.b16 %v683, %v673
        %v804 = vpack.c.b16 %v684, %v674
        %v805 = vpack.c.b16 %v695, %v685
        %v806 = vpack.c.b16 %v696, %v686
        %v807 = vpack.c.b16 %v697, %v687
        %v808 = vpack.c.b16 %v698, %v688
        %v809 = vpack.c.b16 %v699, %v689
        %v810 = vpack.c.b16 %v700, %v690
        %v811 = vpack.c.b16 %v701, %v691
        %v812 = vpack.c.b16 %v702, %v692
        %v813 = vpack.c.b16 %v703, %v693
        %v814 = vpack.c.b16 %v704, %v694
        %v815 = vpack.c.b16 %v715, %v705
        %v816 = vpack.c.b16 %v716, %v706
        %v817 = vpack.c.b16 %v717, %v707
        %v818 = vpack.c.b16 %v718, %v708
        %v819 = vpack.c.b16 %v719, %v709
        %v820 = vpack.c.b16 %v720, %v710
        %v821 = vpack.c.b16 %v721, %v711
        %v822 = vpack.c.b16 %v722, %v712
        %v823 = vpack.c.b16 %v723, %v713
        %v824 = vpack.c.b16 %v724, %v714
        %v825 = vpack.c.b16 %v735, %v725
        %v826 = vpack.c.b16 %v736, %v726
        %v827 = vpack.c.b16 %v737, %v727
        %v828 = vpack.c.b16 %v738, %v728
        %v829 = vpack.c.b16 %v739, %v729
        %v830 = vpack.c.b16 %v740, %v730
        %v831 = vpack.c.b16 %v741, %v731
        %v832 = vpack.c.b16 %v742, %v732
        %v833 = vpack.c.b16 %v743, %v733
        %v834 = vpack.c.b16 %v744, %v734
        %v835 = vpack.c.b16 %v755, %v745
        %v836 = vpack.c.b16 %v756, %v746
        %v837 = vpack.c.b16 %v757, %v747
        %v838 = vpack.c.b16 %v758, %v748
        %v839 = vpack.c.b16 %v759, %v749
        %v840 = vpack.c.b16 %v760, %v750
        %v841 = vpack.c.b16 %v761, %v751
        %v842 = vpack.c.b16 %v762, %v752
        %v843 = vpack.c.b16 %v763, %v753
        %v844 = vpack.c.b16 %v764, %v754
        %v1085 = vunpack.c.l.b16 %v269
        %v1086 = vunpack.c.l.b16 %v270
        %v1087 = vunpack.c.l.b16 %v271
        %v1088 = vunpack.c.l.b16 %v272
        %v1089 = vunpack.c.l.b16 %v273
        %v1090 = vunpack.c.l.b16 %v274
        %v1091 = vunpack.c.l.b16 %v275
        %v1092 = vunpack.c.l.b16 %v276
        %v1093 = vunpack.c.l.b16 %v277
        %v1094 = vunpack.c.l.b16 %v278
        %v1095 = vunpack.c.l.b16 %v279
        %v1096 = vunpack.c.l.b16 %v280
        %v1097 = vunpack.c.l.b16 %v281
        %v1098 = vunpack.c.l.b16 %v282
        %v1099 = vunpack.c.l.b16 %v283
        %v1100 = vunpack.c.l.b16 %v284
        %v1101 = vunpack.c.l.b16 %v285
        %v1102 = vunpack.c.l.b16 %v286
        %v1103 = vunpack.c.l.b16 %v287
        %v1104 = vunpack.c.l.b16 %v288
        %v1105 = vunpack.c.l.b16 %v289
        %v1106 = vunpack.c.l.b16 %v290
        %v1107 = vunpack.c.l.b16 %v291
        %v1108 = vunpack.c.l.b16 %v292
        %v1109 = vunpack.c.l.b16 %v293
        %v1110 = vunpack.c.l.b16 %v294
        %v1111 = vunpack.c.l.b16 %v295
        %v1112 = vunpack.c.l.b16 %v296
        %v1113 = vunpack.c.l.b16 %v297
        %v1114 = vunpack.c.l.b16 %v298
        %v1115 = vunpack.c.l.b16 %v299
        %v1116 = vunpack.c.l.b16 %v300
        %v1117 = vunpack.c.l.b16 %v301
        %v1118 = vunpack.c.l.b16 %v302
        %v1119 = vunpack.c.l.b16 %v303
        %v1120 = vunpack.c.l.b16 %v304
        %v1121 = vunpack.c.l.b16 %v305
        %v1122 = vunpack.c.l.b16 %v306
        %v1123 = vunpack.c.l.b16 %v307
        %v1124 = vunpack.c.l.b16 %v308
        %v1125 = vunpack.c.l.b16 %v309
        %v1126 = vunpack.c.l.b16 %v310
        %v1127 = vunpack.c.l.b16 %v311
        %v1128 = vunpack.c.l.b16 %v312
        %v1129 = vunpack.c.l.b16 %v313
        %v1130 = vunpack.c.l.b16 %v314
        %v1131 = vunpack.c.l.b16 %v315
        %v1132 = vunpack.c.l.b16 %v316
        %v1133 = vunpack.c.l.b16 %v317
        %v1134 = vunpack.c.l.b16 %v318
        %v1135 = vunpack.c.l.b16 %v319
        %v1136 = vunpack.c.l.b16 %v320
        %v1137 = vunpack.c.l.b16 %v321
        %v1138 = vunpack.c.l.b16 %v322
        %v1139 = vunpack.c.l.b16 %v323
        %v1140 = vunpack.c.l.b16 %v324
        %v1141 = vunpack.c.l.b16 %v325
        %v1142 = vunpack.c.l.b16 %v326
        %v1143 = vunpack.c.l.b16 %v327
        %v1144 = vunpack.c.l.b16 %v328
        %v1145 = vunpack.c.l.b16 %v329
        %v1146 = vunpack.c.l.b16 %v330
        %v1147 = vunpack.c.l.b16 %v331
        %v1148 = vunpack.c.l.b16 %v332
        %v1149 = vunpack.c.l.b16 %v333
        %v1150 = vunpack.c.l.b16 %v334
        %v1151 = vunpack.c.l.b16 %v335
        %v1152 = vunpack.c.l.b16 %v336
        %v1153 = vunpack.c.l.b16 %v337
        %v1154 = vunpack.c.l.b16 %v338
        %v1155 = vunpack.c.l.b16 %v339
        %v1156 = vunpack.c.l.b16 %v340
        %v1157 = vunpack.c.l.b16 %v341
        %v1158 = vunpack.c.l.b16 %v342
        %v1159 = vunpack.c.l.b16 %v343
        %v1160 = vunpack.c.l.b16 %v344
        %v1161 = vunpack.c.l.b16 %v345
        %v1162 = vunpack.c.l.b16 %v346
        %v1163 = vunpack.c.l.b16 %v347
        %v1164 = vunpack.c.l.b16 %v348
        %v1165 = vunpack.c.l.b16 %v349
        %v1166 = vunpack.c.l.b16 %v350
        %v1167 = vunpack.c.l.b16 %v351
        %v1168 = vunpack.c.l.b16 %v352
        %v1169 = vunpack.c.l.b16 %v353
        %v1170 = vunpack.c.l.b16 %v354
        %v1171 = vunpack.c.l.b16 %v355
        %v1172 = vunpack.c.l.b16 %v356
        %v1173 = vunpack.c.l.b16 %v357
        %v1174 = vunpack.c.l.b16 %v358
        %v1175 = vunpack.c.l.b16 %v359
        %v1176 = vunpack.c.l.b16 %v360
        %v1177 = vunpack.c.l.b16 %v361
        %v1178 = vunpack.c.l.b16 %v362
        %v1179 = vunpack.c.l.b16 %v363
        %v1180 = vunpack.c.l.b16 %v364
        %v1181 = vunpack.c.l.b16 %v365
        %v1182 = vunpack.c.l.b16 %v366
        %v1183 = vunpack.c.l.b16 %v367
        %v1184 = vunpack.c.l.b16 %v368
        %v1185 = vunpack.c.l.b16 %v369
        %v1186 = vunpack.c.l.b16 %v370
        %v1187 = vunpack.c.l.b16 %v371
        %v1188 = vunpack.c.l.b16 %v372
        %v1189 = vunpack.c.l.b16 %v373
        %v1190 = vunpack.c.l.b16 %v374
        %v1191 = vunpack.c.l.b16 %v375
        %v1192 = vunpack.c.l.b16 %v376
        %v1193 = vunpack.c.l.b16 %v377
        %v1194 = vunpack.c.l.b16 %v378
        %v1195 = vunpack.c.l.b16 %v379
        %v1196 = vunpack.c.l.b16 %v380
        %v1197 = vunpack.c.l.b16 %v381
        %v1198 = vunpack.c.l.b16 %v382
        %v1199 = vunpack.c.l.b16 %v383
        %v1200 = vunpack.c.l.b16 %v384
        %v1201 = vunpack.c.l.b16 %v385
        %v1202 = vunpack.c.l.b16 %v386
        %v1203 = vunpack.c.l.b16 %v387
        %v1204 = vunpack.c.l.b16 %v388
        %v1205 = vunpack.c.l.b16 %v389
        %v1206 = vunpack.c.l.b16 %v390
        %v1207 = vunpack.c.l.b16 %v391
        %v1208 = vunpack.c.l.b16 %v392
        %v1209 = vunpack.c.l.b16 %v393
        %v1210 = vunpack.c.l.b16 %v394
        %v1211 = vunpack.c.l.b16 %v395
        %v1212 = vunpack.c.l.b16 %v396
        %v1213 = vunpack.c.l.b16 %v397
        %v1214 = vunpack.c.l.b16 %v398
        %v1215 = vunpack.c.l.b16 %v399
        %v1216 = vunpack.c.l.b16 %v400
        %v1217 = vunpack.c.l.b16 %v401
        %v1218 = vunpack.c.l.b16 %v402
        %v1219 = vunpack.c.l.b16 %v403
        %v1220 = vunpack.c.l.b16 %v404
        %v1221 = vunpack.c.l.b16 %v405
        %v1222 = vunpack.c.l.b16 %v406
        %v1223 = vunpack.c.l.b16 %v407
        %v1224 = vunpack.c.l.b16 %v408
        %v1225 = vunpack.c.l.b16 %v409
        %v1226 = vunpack.c.l.b16 %v410
        %v1227 = vunpack.c.l.b16 %v411
        %v1228 = vunpack.c.l.b16 %v412
        %v1229 = vunpack.c.l.b16 %v413
        %v1230 = vunpack.c.l.b16 %v414
        %v1231 = vunpack.c.l.b16 %v415
        %v1232 = vunpack.c.l.b16 %v416
        %v1233 = vunpack.c.l.b16 %v417
        %v1234 = vunpack.c.l.b16 %v418
        %v1235 = vunpack.c.l.b16 %v419
        %v1236 = vunpack.c.l.b16 %v420
        %v1237 = vunpack.c.l.b16 %v421
        %v1238 = vunpack.c.l.b16 %v422
        %v1239 = vunpack.c.l.b16 %v423
        %v1240 = vunpack.c.l.b16 %v424
        %v1241 = vunpack.c.l.b16 %v425
        %v1242 = vunpack.c.l.b16 %v426
        %v1243 = vunpack.c.l.b16 %v427
        %v1244 = vunpack.c.l.b16 %v428
        %v1245 = vpack.c.b16 %v1086, %v1085
        %v1246 = vpack.c.b16 %v1088, %v1087
        %v1247 = vpack.c.b16 %v1090, %v1089
        %v1248 = vpack.c.b16 %v1092, %v1091
        %v1249 = vpack.c.b16 %v1094, %v1093
        %v1250 = vpack.c.b16 %v1096, %v1095
        %v1251 = vpack.c.b16 %v1098, %v1097
        %v1252 = vpack.c.b16 %v1100, %v1099
        %v1253 = vpack.c.b16 %v1102, %v1101
        %v1254 = vpack.c.b16 %v1104, %v1103
        %v1255 = vpack.c.b16 %v1106, %v1105
        %v1256 = vpack.c.b16 %v1108, %v1107
        %v1257 = vpack.c.b16 %v1110, %v1109
        %v1258 = vpack.c.b16 %v1112, %v1111
        %v1259 = vpack.c.b16 %v1114, %v1113
        %v1260 = vpack.c.b16 %v1116, %v1115
        %v1261 = vpack.c.b16 %v1118, %v1117
        %v1262 = vpack.c.b16 %v1120, %v1119
        %v1263 = vpack.c.b16 %v1122, %v1121
        %v1264 = vpack.c.b16 %v1124, %v1123
        %v1265 = vpack.c.b16 %v1126, %v1125
        %v1266 = vpack.c.b16 %v1128, %v1127
        %v1267 = vpack.c.b16 %v1130, %v1129
        %v1268 = vpack.c.b16 %v1132, %v1131
        %v1269 = vpack.c.b16 %v1134, %v1133
        %v1270 = vpack.c.b16 %v1136, %v1135
        %v1271 = vpack.c.b16 %v1138, %v1137
        %v1272 = vpack.c.b16 %v1140, %v1139
        %v1273 = vpack.c.b16 %v1142, %v1141
        %v1274 = vpack.c.b16 %v1144, %v1143
        %v1275 = vpack.c.b16 %v1146, %v1145
        %v1276 = vpack.c.b16 %v1148, %v1147
        %v1277 = vpack.c.b16 %v1150, %v1149
        %v1278 = vpack.c.b16 %v1152, %v1151
        %v1279 = vpack.c.b16 %v1154, %v1153
        %v1280 = vpack.c.b16 %v1156, %v1155
        %v1281 = vpack.c.b16 %v1158, %v1157
        %v1282 = vpack.c.b16 %v1160, %v1159
        %v1283 = vpack.c.b16 %v1162, %v1161
        %v1284 = vpack.c.b16 %v1164, %v1163
        %v1285 = vpack.c.b16 %v1166, %v1165
        %v1286 = vpack.c.b16 %v1168, %v1167
        %v1287 = vpack.c.b16 %v1170, %v1169
        %v1288 = vpack.c.b16 %v1172, %v1171
        %v1289 = vpack.c.b16 %v1174, %v1173
        %v1290 = vpack.c.b16 %v1176, %v1175
        %v1291 = vpack.c.b16 %v1178, %v1177
        %v1292 = vpack.c.b16 %v1180, %v1179
        %v1293 = vpack.c.b16 %v1182, %v1181
        %v1294 = vpack.c.b16 %v1184, %v1183
        %v1295 = vpack.c.b16 %v1186, %v1185
        %v1296 = vpack.c.b16 %v1188, %v1187
        %v1297 = vpack.c.b16 %v1190, %v1189
        %v1298 = vpack.c.b16 %v1192, %v1191
        %v1299 = vpack.c.b16 %v1194, %v1193
        %v1300 = vpack.c.b16 %v1196, %v1195
        %v1301 = vpack.c.b16 %v1198, %v1197
        %v1302 = vpack.c.b16 %v1200, %v1199
        %v1303 = vpack.c.b16 %v1202, %v1201
        %v1304 = vpack.c.b16 %v1204, %v1203
        %v1305 = vpack.c.b16 %v1206, %v1205
        %v1306 = vpack.c.b16 %v1208, %v1207
        %v1307 = vpack.c.b16 %v1210, %v1209
        %v1308 = vpack.c.b16 %v1212, %v1211
        %v1309 = vpack.c.b16 %v1214, %v1213
        %v1310 = vpack.c.b16 %v1216, %v1215
        %v1311 = vpack.c.b16 %v1218, %v1217
        %v1312 = vpack.c.b16 %v1220, %v1219
        %v1313 = vpack.c.b16 %v1222, %v1221
        %v1314 = vpack.c.b16 %v1224, %v1223
        %v1315 = vpack.c.b16 %v1226, %v1225
        %v1316 = vpack.c.b16 %v1228, %v1227
        %v1317 = vpack.c.b16 %v1230, %v1229
        %v1318 = vpack.c.b16 %v1232, %v1231
        %v1319 = vpack.c.b16 %v1234, %v1233
        %v1320 = vpack.c.b16 %v1236, %v1235
        %v1321 = vpack.c.b16 %v1238, %v1237
        %v1322 = vpack.c.b16 %v1240, %v1239
        %v1323 = vpack.c.b16 %v1242, %v1241
        %v1324 = vpack.c.b16 %v1244, %v1243
        %1405 = vmatpush.bf16.msra.mxu0 %v1252
        %1406 = vmatpush.bf16.msra.mxu0 %v1251
        %1407 = vmatpush.bf16.msra.mxu0 %v1250
        %1408 = vmatpush.bf16.msra.mxu0 %v1249
        %1409 = vmatpush.bf16.msra.mxu0 %v1248
        %1410 = vmatpush.bf16.msra.mxu0 %v1247
        %1411 = vmatpush.bf16.msra.mxu0 %v1246
        %1412 = vmatpush.bf16.msra.mxu0 %v1245
        %1413 = vmatmul.bf16.gmra.mxu0 %v765
        %v1414 = vpop.f32.mrf.mxu0
        %v1415 = vadd.f32 0.0, %v1414
        %v1416 = vpop.f32.mrf.mxu0
        %v1417 = vadd.f32 0.0, %v1416
        %1418 = vmatmul.bf16.gmra.mxu0 %v775
        %v1419 = vpop.f32.mrf.mxu0
        %v1420 = vadd.f32 0.0, %v1419
        %v1421 = vpop.f32.mrf.mxu0
        %v1422 = vadd.f32 0.0, %v1421
        %1423 = vmatmul.bf16.gmra.mxu0 %v785
        %v1424 = vpop.f32.mrf.mxu0
        %v1425 = vadd.f32 0.0, %v1424
        %v1426 = vpop.f32.mrf.mxu0
        %v1427 = vadd.f32 0.0, %v1426
        %1428 = vmatmul.bf16.gmra.mxu0 %v795
        %v1429 = vpop.f32.mrf.mxu0
        %v1430 = vadd.f32 0.0, %v1429
        %v1431 = vpop.f32.mrf.mxu0
        %v1432 = vadd.f32 0.0, %v1431
        %1433 = vmatmul.bf16.gmra.mxu0 %v805
        %v1434 = vpop.f32.mrf.mxu0
        %v1435 = vadd.f32 0.0, %v1434
        %v1436 = vpop.f32.mrf.mxu0
        %v1437 = vadd.f32 0.0, %v1436
        %1438 = vmatmul.bf16.gmra.mxu0 %v815
        %v1439 = vpop.f32.mrf.mxu0
        %v1440 = vadd.f32 0.0, %v1439
        %v1441 = vpop.f32.mrf.mxu0
        %v1442 = vadd.f32 0.0, %v1441
        %1443 = vmatmul.bf16.gmra.mxu0 %v825
        %v1444 = vpop.f32.mrf.mxu0
        %v1445 = vadd.f32 0.0, %v1444
        %v1446 = vpop.f32.mrf.mxu0
        %v1447 = vadd.f32 0.0, %v1446
        %1448 = vmatmul.bf16.gmra.mxu0 %v835
        %v1449 = vpop.f32.mrf.mxu0
        %v1450 = vadd.f32 0.0, %v1449
        %v1451 = vpop.f32.mrf.mxu0
        %v1452 = vadd.f32 0.0, %v1451
        %1453 = vdwg.mxu0
        %1454 = vmatpush.bf16.msra.mxu0 %v1260
        %1455 = vmatpush.bf16.msra.mxu0 %v1259
        %1456 = vmatpush.bf16.msra.mxu0 %v1258
        %1457 = vmatpush.bf16.msra.mxu0 %v1257
        %1458 = vmatpush.bf16.msra.mxu0 %v1256
        %1459 = vmatpush.bf16.msra.mxu0 %v1255
        %1460 = vmatpush.bf16.msra.mxu0 %v1254
        %1461 = vmatpush.bf16.msra.mxu0 %v1253
        %1462 = vmatmul.bf16.gmra.mxu0 %v766
        %v1463 = vpop.f32.mrf.mxu0
        %v1464 = vadd.f32 %v1415, %v1463
        %v1465 = vpop.f32.mrf.mxu0
        %v1466 = vadd.f32 %v1417, %v1465
        %1467 = vmatmul.bf16.gmra.mxu0 %v776
        %v1468 = vpop.f32.mrf.mxu0
        %v1469 = vadd.f32 %v1420, %v1468
        %v1470 = vpop.f32.mrf.mxu0
        %v1471 = vadd.f32 %v1422, %v1470
        %1472 = vmatmul.bf16.gmra.mxu0 %v786
        %v1473 = vpop.f32.mrf.mxu0
        %v1474 = vadd.f32 %v1425, %v1473
        %v1475 = vpop.f32.mrf.mxu0
        %v1476 = vadd.f32 %v1427, %v1475
        %1477 = vmatmul.bf16.gmra.mxu0 %v796
        %v1478 = vpop.f32.mrf.mxu0
        %v1479 = vadd.f32 %v1430, %v1478
        %v1480 = vpop.f32.mrf.mxu0
        %v1481 = vadd.f32 %v1432, %v1480
        %1482 = vmatmul.bf16.gmra.mxu0 %v806
        %v1483 = vpop.f32.mrf.mxu0
        %v1484 = vadd.f32 %v1435, %v1483
        %v1485 = vpop.f32.mrf.mxu0
        %v1486 = vadd.f32 %v1437, %v1485
        %1487 = vmatmul.bf16.gmra.mxu0 %v816
        %v1488 = vpop.f32.mrf.mxu0
        %v1489 = vadd.f32 %v1440, %v1488
        %v1490 = vpop.f32.mrf.mxu0
        %v1491 = vadd.f32 %v1442, %v1490
        %1492 = vmatmul.bf16.gmra.mxu0 %v826
        %v1493 = vpop.f32.mrf.mxu0
        %v1494 = vadd.f32 %v1445, %v1493
        %v1495 = vpop.f32.mrf.mxu0
        %v1496 = vadd.f32 %v1447, %v1495
        %1497 = vmatmul.bf16.gmra.mxu0 %v836
        %v1498 = vpop.f32.mrf.mxu0
        %v1499 = vadd.f32 %v1450, %v1498
        %v1500 = vpop.f32.mrf.mxu0
        %v1501 = vadd.f32 %v1452, %v1500
        %1502 = vdwg.mxu0
        %1503 = vmatpush.bf16.msra.mxu0 %v1268
        %1504 = vmatpush.bf16.msra.mxu0 %v1267
        %1505 = vmatpush.bf16.msra.mxu0 %v1266
        %1506 = vmatpush.bf16.msra.mxu0 %v1265
        %1507 = vmatpush.bf16.msra.mxu0 %v1264
        %1508 = vmatpush.bf16.msra.mxu0 %v1263
        %1509 = vmatpush.bf16.msra.mxu0 %v1262
        %1510 = vmatpush.bf16.msra.mxu0 %v1261
        %1511 = vmatmul.bf16.gmra.mxu0 %v767
        %v1512 = vpop.f32.mrf.mxu0
        %v1513 = vadd.f32 %v1464, %v1512
        %v1514 = vpop.f32.mrf.mxu0
        %v1515 = vadd.f32 %v1466, %v1514
        %1516 = vmatmul.bf16.gmra.mxu0 %v777
        %v1517 = vpop.f32.mrf.mxu0
        %v1518 = vadd.f32 %v1469, %v1517
        %v1519 = vpop.f32.mrf.mxu0
        %v1520 = vadd.f32 %v1471, %v1519
        %1521 = vmatmul.bf16.gmra.mxu0 %v787
        %v1522 = vpop.f32.mrf.mxu0
        %v1523 = vadd.f32 %v1474, %v1522
        %v1524 = vpop.f32.mrf.mxu0
        %v1525 = vadd.f32 %v1476, %v1524
        %1526 = vmatmul.bf16.gmra.mxu0 %v797
        %v1527 = vpop.f32.mrf.mxu0
        %v1528 = vadd.f32 %v1479, %v1527
        %v1529 = vpop.f32.mrf.mxu0
        %v1530 = vadd.f32 %v1481, %v1529
        %1531 = vmatmul.bf16.gmra.mxu0 %v807
        %v1532 = vpop.f32.mrf.mxu0
        %v1533 = vadd.f32 %v1484, %v1532
        %v1534 = vpop.f32.mrf.mxu0
        %v1535 = vadd.f32 %v1486, %v1534
        %1536 = vmatmul.bf16.gmra.mxu0 %v817
        %v1537 = vpop.f32.mrf.mxu0
        %v1538 = vadd.f32 %v1489, %v1537
        %v1539 = vpop.f32.mrf.mxu0
        %v1540 = vadd.f32 %v1491, %v1539
        %1541 = vmatmul.bf16.gmra.mxu0 %v827
        %v1542 = vpop.f32.mrf.mxu0
        %v1543 = vadd.f32 %v1494, %v1542
        %v1544 = vpop.f32.mrf.mxu0
        %v1545 = vadd.f32 %v1496, %v1544
        %1546 = vmatmul.bf16.gmra.mxu0 %v837
        %v1547 = vpop.f32.mrf.mxu0
        %v1548 = vadd.f32 %v1499, %v1547
        %v1549 = vpop.f32.mrf.mxu0
        %v1550 = vadd.f32 %v1501, %v1549
        %1551 = vdwg.mxu0
        %1552 = vmatpush.bf16.msra.mxu0 %v1276
        %1553 = vmatpush.bf16.msra.mxu0 %v1275
        %1554 = vmatpush.bf16.msra.mxu0 %v1274
        %1555 = vmatpush.bf16.msra.mxu0 %v1273
        %1556 = vmatpush.bf16.msra.mxu0 %v1272
        %1557 = vmatpush.bf16.msra.mxu0 %v1271
        %1558 = vmatpush.bf16.msra.mxu0 %v1270
        %1559 = vmatpush.bf16.msra.mxu0 %v1269
        %1560 = vmatmul.bf16.gmra.mxu0 %v768
        %v1561 = vpop.f32.mrf.mxu0
        %v1562 = vadd.f32 %v1513, %v1561
        %v1563 = vpop.f32.mrf.mxu0
        %v1564 = vadd.f32 %v1515, %v1563
        %1565 = vmatmul.bf16.gmra.mxu0 %v778
        %v1566 = vpop.f32.mrf.mxu0
        %v1567 = vadd.f32 %v1518, %v1566
        %v1568 = vpop.f32.mrf.mxu0
        %v1569 = vadd.f32 %v1520, %v1568
        %1570 = vmatmul.bf16.gmra.mxu0 %v788
        %v1571 = vpop.f32.mrf.mxu0
        %v1572 = vadd.f32 %v1523, %v1571
        %v1573 = vpop.f32.mrf.mxu0
        %v1574 = vadd.f32 %v1525, %v1573
        %1575 = vmatmul.bf16.gmra.mxu0 %v798
        %v1576 = vpop.f32.mrf.mxu0
        %v1577 = vadd.f32 %v1528, %v1576
        %v1578 = vpop.f32.mrf.mxu0
        %v1579 = vadd.f32 %v1530, %v1578
        %1580 = vmatmul.bf16.gmra.mxu0 %v808
        %v1581 = vpop.f32.mrf.mxu0
        %v1582 = vadd.f32 %v1533, %v1581
        %v1583 = vpop.f32.mrf.mxu0
        %v1584 = vadd.f32 %v1535, %v1583
        %1585 = vmatmul.bf16.gmra.mxu0 %v818
        %v1586 = vpop.f32.mrf.mxu0
        %v1587 = vadd.f32 %v1538, %v1586
        %v1588 = vpop.f32.mrf.mxu0
        %v1589 = vadd.f32 %v1540, %v1588
        %1590 = vmatmul.bf16.gmra.mxu0 %v828
        %v1591 = vpop.f32.mrf.mxu0
        %v1592 = vadd.f32 %v1543, %v1591
        %v1593 = vpop.f32.mrf.mxu0
        %v1594 = vadd.f32 %v1545, %v1593
        %1595 = vmatmul.bf16.gmra.mxu0 %v838
        %v1596 = vpop.f32.mrf.mxu0
        %v1597 = vadd.f32 %v1548, %v1596
        %v1598 = vpop.f32.mrf.mxu0
        %v1599 = vadd.f32 %v1550, %v1598
        %1600 = vdwg.mxu0
        %1601 = vmatpush.bf16.msra.mxu0 %v1284
        %1602 = vmatpush.bf16.msra.mxu0 %v1283
        %1603 = vmatpush.bf16.msra.mxu0 %v1282
        %1604 = vmatpush.bf16.msra.mxu0 %v1281
        %1605 = vmatpush.bf16.msra.mxu0 %v1280
        %1606 = vmatpush.bf16.msra.mxu0 %v1279
        %1607 = vmatpush.bf16.msra.mxu0 %v1278
        %1608 = vmatpush.bf16.msra.mxu0 %v1277
        %1609 = vmatmul.bf16.gmra.mxu0 %v769
        %v1610 = vpop.f32.mrf.mxu0
        %v1611 = vadd.f32 %v1562, %v1610
        %v1612 = vpop.f32.mrf.mxu0
        %v1613 = vadd.f32 %v1564, %v1612
        %1614 = vmatmul.bf16.gmra.mxu0 %v779
        %v1615 = vpop.f32.mrf.mxu0
        %v1616 = vadd.f32 %v1567, %v1615
        %v1617 = vpop.f32.mrf.mxu0
        %v1618 = vadd.f32 %v1569, %v1617
        %1619 = vmatmul.bf16.gmra.mxu0 %v789
        %v1620 = vpop.f32.mrf.mxu0
        %v1621 = vadd.f32 %v1572, %v1620
        %v1622 = vpop.f32.mrf.mxu0
        %v1623 = vadd.f32 %v1574, %v1622
        %1624 = vmatmul.bf16.gmra.mxu0 %v799
        %v1625 = vpop.f32.mrf.mxu0
        %v1626 = vadd.f32 %v1577, %v1625
        %v1627 = vpop.f32.mrf.mxu0
        %v1628 = vadd.f32 %v1579, %v1627
        %1629 = vmatmul.bf16.gmra.mxu0 %v809
        %v1630 = vpop.f32.mrf.mxu0
        %v1631 = vadd.f32 %v1582, %v1630
        %v1632 = vpop.f32.mrf.mxu0
        %v1633 = vadd.f32 %v1584, %v1632
        %1634 = vmatmul.bf16.gmra.mxu0 %v819
        %v1635 = vpop.f32.mrf.mxu0
        %v1636 = vadd.f32 %v1587, %v1635
        %v1637 = vpop.f32.mrf.mxu0
        %v1638 = vadd.f32 %v1589, %v1637
        %1639 = vmatmul.bf16.gmra.mxu0 %v829
        %v1640 = vpop.f32.mrf.mxu0
        %v1641 = vadd.f32 %v1592, %v1640
        %v1642 = vpop.f32.mrf.mxu0
        %v1643 = vadd.f32 %v1594, %v1642
        %1644 = vmatmul.bf16.gmra.mxu0 %v839
        %v1645 = vpop.f32.mrf.mxu0
        %v1646 = vadd.f32 %v1597, %v1645
        %v1647 = vpop.f32.mrf.mxu0
        %v1648 = vadd.f32 %v1599, %v1647
        %1649 = vdwg.mxu0
        %1650 = vmatpush.bf16.msra.mxu0 %v1292
        %1651 = vmatpush.bf16.msra.mxu0 %v1291
        %1652 = vmatpush.bf16.msra.mxu0 %v1290
        %1653 = vmatpush.bf16.msra.mxu0 %v1289
        %1654 = vmatpush.bf16.msra.mxu0 %v1288
        %1655 = vmatpush.bf16.msra.mxu0 %v1287
        %1656 = vmatpush.bf16.msra.mxu0 %v1286
        %1657 = vmatpush.bf16.msra.mxu0 %v1285
        %1658 = vmatmul.bf16.gmra.mxu0 %v770
        %v1659 = vpop.f32.mrf.mxu0
        %v1660 = vadd.f32 %v1611, %v1659
        %v1661 = vpop.f32.mrf.mxu0
        %v1662 = vadd.f32 %v1613, %v1661
        %1663 = vmatmul.bf16.gmra.mxu0 %v780
        %v1664 = vpop.f32.mrf.mxu0
        %v1665 = vadd.f32 %v1616, %v1664
        %v1666 = vpop.f32.mrf.mxu0
        %v1667 = vadd.f32 %v1618, %v1666
        %1668 = vmatmul.bf16.gmra.mxu0 %v790
        %v1669 = vpop.f32.mrf.mxu0
        %v1670 = vadd.f32 %v1621, %v1669
        %v1671 = vpop.f32.mrf.mxu0
        %v1672 = vadd.f32 %v1623, %v1671
        %1673 = vmatmul.bf16.gmra.mxu0 %v800
        %v1674 = vpop.f32.mrf.mxu0
        %v1675 = vadd.f32 %v1626, %v1674
        %v1676 = vpop.f32.mrf.mxu0
        %v1677 = vadd.f32 %v1628, %v1676
        %1678 = vmatmul.bf16.gmra.mxu0 %v810
        %v1679 = vpop.f32.mrf.mxu0
        %v1680 = vadd.f32 %v1631, %v1679
        %v1681 = vpop.f32.mrf.mxu0
        %v1682 = vadd.f32 %v1633, %v1681
        %1683 = vmatmul.bf16.gmra.mxu0 %v820
        %v1684 = vpop.f32.mrf.mxu0
        %v1685 = vadd.f32 %v1636, %v1684
        %v1686 = vpop.f32.mrf.mxu0
        %v1687 = vadd.f32 %v1638, %v1686
        %1688 = vmatmul.bf16.gmra.mxu0 %v830
        %v1689 = vpop.f32.mrf.mxu0
        %v1690 = vadd.f32 %v1641, %v1689
        %v1691 = vpop.f32.mrf.mxu0
        %v1692 = vadd.f32 %v1643, %v1691
        %1693 = vmatmul.bf16.gmra.mxu0 %v840
        %v1694 = vpop.f32.mrf.mxu0
        %v1695 = vadd.f32 %v1646, %v1694
        %v1696 = vpop.f32.mrf.mxu0
        %v1697 = vadd.f32 %v1648, %v1696
        %1698 = vdwg.mxu0
        %1699 = vmatpush.bf16.msra.mxu0 %v1300
        %1700 = vmatpush.bf16.msra.mxu0 %v1299
        %1701 = vmatpush.bf16.msra.mxu0 %v1298
        %1702 = vmatpush.bf16.msra.mxu0 %v1297
        %1703 = vmatpush.bf16.msra.mxu0 %v1296
        %1704 = vmatpush.bf16.msra.mxu0 %v1295
        %1705 = vmatpush.bf16.msra.mxu0 %v1294
        %1706 = vmatpush.bf16.msra.mxu0 %v1293
        %1707 = vmatmul.bf16.gmra.mxu0 %v771
        %v1708 = vpop.f32.mrf.mxu0
        %v1709 = vadd.f32 %v1660, %v1708
        %v1710 = vpop.f32.mrf.mxu0
        %v1711 = vadd.f32 %v1662, %v1710
        %1712 = vmatmul.bf16.gmra.mxu0 %v781
        %v1713 = vpop.f32.mrf.mxu0
        %v1714 = vadd.f32 %v1665, %v1713
        %v1715 = vpop.f32.mrf.mxu0
        %v1716 = vadd.f32 %v1667, %v1715
        %1717 = vmatmul.bf16.gmra.mxu0 %v791
        %v1718 = vpop.f32.mrf.mxu0
        %v1719 = vadd.f32 %v1670, %v1718
        %v1720 = vpop.f32.mrf.mxu0
        %v1721 = vadd.f32 %v1672, %v1720
        %1722 = vmatmul.bf16.gmra.mxu0 %v801
        %v1723 = vpop.f32.mrf.mxu0
        %v1724 = vadd.f32 %v1675, %v1723
        %v1725 = vpop.f32.mrf.mxu0
        %v1726 = vadd.f32 %v1677, %v1725
        %1727 = vmatmul.bf16.gmra.mxu0 %v811
        %v1728 = vpop.f32.mrf.mxu0
        %v1729 = vadd.f32 %v1680, %v1728
        %v1730 = vpop.f32.mrf.mxu0
        %v1731 = vadd.f32 %v1682, %v1730
        %1732 = vmatmul.bf16.gmra.mxu0 %v821
        %v1733 = vpop.f32.mrf.mxu0
        %v1734 = vadd.f32 %v1685, %v1733
        %v1735 = vpop.f32.mrf.mxu0
        %v1736 = vadd.f32 %v1687, %v1735
        %1737 = vmatmul.bf16.gmra.mxu0 %v831
        %v1738 = vpop.f32.mrf.mxu0
        %v1739 = vadd.f32 %v1690, %v1738
        %v1740 = vpop.f32.mrf.mxu0
        %v1741 = vadd.f32 %v1692, %v1740
        %1742 = vmatmul.bf16.gmra.mxu0 %v841
        %v1743 = vpop.f32.mrf.mxu0
        %v1744 = vadd.f32 %v1695, %v1743
        %v1745 = vpop.f32.mrf.mxu0
        %v1746 = vadd.f32 %v1697, %v1745
        %1747 = vdwg.mxu0
        %1748 = vmatpush.bf16.msra.mxu0 %v1308
        %1749 = vmatpush.bf16.msra.mxu0 %v1307
        %1750 = vmatpush.bf16.msra.mxu0 %v1306
        %1751 = vmatpush.bf16.msra.mxu0 %v1305
        %1752 = vmatpush.bf16.msra.mxu0 %v1304
        %1753 = vmatpush.bf16.msra.mxu0 %v1303
        %1754 = vmatpush.bf16.msra.mxu0 %v1302
        %1755 = vmatpush.bf16.msra.mxu0 %v1301
        %1756 = vmatmul.bf16.gmra.mxu0 %v772
        %v1757 = vpop.f32.mrf.mxu0
        %v1758 = vadd.f32 %v1709, %v1757
        %v1759 = vpop.f32.mrf.mxu0
        %v1760 = vadd.f32 %v1711, %v1759
        %1761 = vmatmul.bf16.gmra.mxu0 %v782
        %v1762 = vpop.f32.mrf.mxu0
        %v1763 = vadd.f32 %v1714, %v1762
        %v1764 = vpop.f32.mrf.mxu0
        %v1765 = vadd.f32 %v1716, %v1764
        %1766 = vmatmul.bf16.gmra.mxu0 %v792
        %v1767 = vpop.f32.mrf.mxu0
        %v1768 = vadd.f32 %v1719, %v1767
        %v1769 = vpop.f32.mrf.mxu0
        %v1770 = vadd.f32 %v1721, %v1769
        %1771 = vmatmul.bf16.gmra.mxu0 %v802
        %v1772 = vpop.f32.mrf.mxu0
        %v1773 = vadd.f32 %v1724, %v1772
        %v1774 = vpop.f32.mrf.mxu0
        %v1775 = vadd.f32 %v1726, %v1774
        %1776 = vmatmul.bf16.gmra.mxu0 %v812
        %v1777 = vpop.f32.mrf.mxu0
        %v1778 = vadd.f32 %v1729, %v1777
        %v1779 = vpop.f32.mrf.mxu0
        %v1780 = vadd.f32 %v1731, %v1779
        %1781 = vmatmul.bf16.gmra.mxu0 %v822
        %v1782 = vpop.f32.mrf.mxu0
        %v1783 = vadd.f32 %v1734, %v1782
        %v1784 = vpop.f32.mrf.mxu0
        %v1785 = vadd.f32 %v1736, %v1784
        %1786 = vmatmul.bf16.gmra.mxu0 %v832
        %v1787 = vpop.f32.mrf.mxu0
        %v1788 = vadd.f32 %v1739, %v1787
        %v1789 = vpop.f32.mrf.mxu0
        %v1790 = vadd.f32 %v1741, %v1789
        %1791 = vmatmul.bf16.gmra.mxu0 %v842
        %v1792 = vpop.f32.mrf.mxu0
        %v1793 = vadd.f32 %v1744, %v1792
        %v1794 = vpop.f32.mrf.mxu0
        %v1795 = vadd.f32 %v1746, %v1794
        %1796 = vdwg.mxu0
        %1797 = vmatpush.bf16.msra.mxu0 %v1316
        %1798 = vmatpush.bf16.msra.mxu0 %v1315
        %1799 = vmatpush.bf16.msra.mxu0 %v1314
        %1800 = vmatpush.bf16.msra.mxu0 %v1313
        %1801 = vmatpush.bf16.msra.mxu0 %v1312
        %1802 = vmatpush.bf16.msra.mxu0 %v1311
        %1803 = vmatpush.bf16.msra.mxu0 %v1310
        %1804 = vmatpush.bf16.msra.mxu0 %v1309
        %1805 = vmatmul.bf16.gmra.mxu0 %v773
        %v1806 = vpop.f32.mrf.mxu0
        %v1807 = vadd.f32 %v1758, %v1806
        %v1808 = vpop.f32.mrf.mxu0
        %v1809 = vadd.f32 %v1760, %v1808
        %1810 = vmatmul.bf16.gmra.mxu0 %v783
        %v1811 = vpop.f32.mrf.mxu0
        %v1812 = vadd.f32 %v1763, %v1811
        %v1813 = vpop.f32.mrf.mxu0
        %v1814 = vadd.f32 %v1765, %v1813
        %1815 = vmatmul.bf16.gmra.mxu0 %v793
        %v1816 = vpop.f32.mrf.mxu0
        %v1817 = vadd.f32 %v1768, %v1816
        %v1818 = vpop.f32.mrf.mxu0
        %v1819 = vadd.f32 %v1770, %v1818
        %1820 = vmatmul.bf16.gmra.mxu0 %v803
        %v1821 = vpop.f32.mrf.mxu0
        %v1822 = vadd.f32 %v1773, %v1821
        %v1823 = vpop.f32.mrf.mxu0
        %v1824 = vadd.f32 %v1775, %v1823
        %1825 = vmatmul.bf16.gmra.mxu0 %v813
        %v1826 = vpop.f32.mrf.mxu0
        %v1827 = vadd.f32 %v1778, %v1826
        %v1828 = vpop.f32.mrf.mxu0
        %v1829 = vadd.f32 %v1780, %v1828
        %1830 = vmatmul.bf16.gmra.mxu0 %v823
        %v1831 = vpop.f32.mrf.mxu0
        %v1832 = vadd.f32 %v1783, %v1831
        %v1833 = vpop.f32.mrf.mxu0
        %v1834 = vadd.f32 %v1785, %v1833
        %1835 = vmatmul.bf16.gmra.mxu0 %v833
        %v1836 = vpop.f32.mrf.mxu0
        %v1837 = vadd.f32 %v1788, %v1836
        %v1838 = vpop.f32.mrf.mxu0
        %v1839 = vadd.f32 %v1790, %v1838
        %1840 = vmatmul.bf16.gmra.mxu0 %v843
        %v1841 = vpop.f32.mrf.mxu0
        %v1842 = vadd.f32 %v1793, %v1841
        %v1843 = vpop.f32.mrf.mxu0
        %v1844 = vadd.f32 %v1795, %v1843
        %1845 = vdwg.mxu0
        %1846 = vmatpush.bf16.msra.mxu0 %v1324
        %1847 = vmatpush.bf16.msra.mxu0 %v1323
        %1848 = vmatpush.bf16.msra.mxu0 %v1322
        %1849 = vmatpush.bf16.msra.mxu0 %v1321
        %1850 = vmatpush.bf16.msra.mxu0 %v1320
        %1851 = vmatpush.bf16.msra.mxu0 %v1319
        %1852 = vmatpush.bf16.msra.mxu0 %v1318
        %1853 = vmatpush.bf16.msra.mxu0 %v1317
        %1854 = vmatmul.bf16.gmra.mxu0 %v774
        %v1855 = vpop.f32.mrf.mxu0
        %v1856 = vadd.f32 %v1807, %v1855
        %v1857 = vpop.f32.mrf.mxu0
        %v1858 = vadd.f32 %v1809, %v1857
        %1859 = vmatmul.bf16.gmra.mxu0 %v784
        %v1860 = vpop.f32.mrf.mxu0
        %v1861 = vadd.f32 %v1812, %v1860
        %v1862 = vpop.f32.mrf.mxu0
        %v1863 = vadd.f32 %v1814, %v1862
        %1864 = vmatmul.bf16.gmra.mxu0 %v794
        %v1865 = vpop.f32.mrf.mxu0
        %v1866 = vadd.f32 %v1817, %v1865
        %v1867 = vpop.f32.mrf.mxu0
        %v1868 = vadd.f32 %v1819, %v1867
        %1869 = vmatmul.bf16.gmra.mxu0 %v804
        %v1870 = vpop.f32.mrf.mxu0
        %v1871 = vadd.f32 %v1822, %v1870
        %v1872 = vpop.f32.mrf.mxu0
        %v1873 = vadd.f32 %v1824, %v1872
        %1874 = vmatmul.bf16.gmra.mxu0 %v814
        %v1875 = vpop.f32.mrf.mxu0
        %v1876 = vadd.f32 %v1827, %v1875
        %v1877 = vpop.f32.mrf.mxu0
        %v1878 = vadd.f32 %v1829, %v1877
        %1879 = vmatmul.bf16.gmra.mxu0 %v824
        %v1880 = vpop.f32.mrf.mxu0
        %v1881 = vadd.f32 %v1832, %v1880
        %v1882 = vpop.f32.mrf.mxu0
        %v1883 = vadd.f32 %v1834, %v1882
        %1884 = vmatmul.bf16.gmra.mxu0 %v834
        %v1885 = vpop.f32.mrf.mxu0
        %v1886 = vadd.f32 %v1837, %v1885
        %v1887 = vpop.f32.mrf.mxu0
        %v1888 = vadd.f32 %v1839, %v1887
        %1889 = vmatmul.bf16.gmra.mxu0 %v844
        %v1890 = vpop.f32.mrf.mxu0
        %v1891 = vadd.f32 %v1842, %v1890
        %v1892 = vpop.f32.mrf.mxu0
        %v1893 = vadd.f32 %v1844, %v1892
        %1894 = vdwg.mxu0
        %v1895 = vadd.f32 %v429, %v1856
        %v1896 = vadd.f32 %v430, %v1858
        %v1897 = vadd.f32 %v431, %v1861
        %v1898 = vadd.f32 %v432, %v1863
        %v1899 = vadd.f32 %v433, %v1866
        %v1900 = vadd.f32 %v434, %v1868
        %v1901 = vadd.f32 %v435, %v1871
        %v1902 = vadd.f32 %v436, %v1873
        %v1903 = vadd.f32 %v437, %v1876
        %v1904 = vadd.f32 %v438, %v1878
        %v1905 = vadd.f32 %v439, %v1881
        %v1906 = vadd.f32 %v440, %v1883
        %v1907 = vadd.f32 %v441, %v1886
        %v1908 = vadd.f32 %v442, %v1888
        %v1909 = vadd.f32 %v443, %v1891
        %v1910 = vadd.f32 %v444, %v1893
        %1911 = vst [vmem:[#allocation2] sm:$0xff] %v1895
        %1912 = vst [vmem:[#allocation2 + $0x8] sm:$0xff] %v1896
        %1913 = vst [vmem:[#allocation2 + $0x10] sm:$0xff] %v1897
        %1914 = vst [vmem:[#allocation2 + $0x18] sm:$0xff] %v1898
        %1915 = vst [vmem:[#allocation2 + $0x20] sm:$0xff] %v1899
        %1916 = vst [vmem:[#allocation2 + $0x28] sm:$0xff] %v1900
        %1917 = vst [vmem:[#allocation2 + $0x30] sm:$0xff] %v1901
        %1918 = vst [vmem:[#allocation2 + $0x38] sm:$0xff] %v1902
        %1919 = vst [vmem:[#allocation2 + $0x40] sm:$0xff] %v1903
        %1920 = vst [vmem:[#allocation2 + $0x48] sm:$0xff] %v1904
        %1921 = vst [vmem:[#allocation2 + $0x50] sm:$0xff] %v1905
        %1922 = vst [vmem:[#allocation2 + $0x58] sm:$0xff] %v1906
        %1923 = vst [vmem:[#allocation2 + $0x60] sm:$0xff] %v1907
        %1924 = vst [vmem:[#allocation2 + $0x68] sm:$0xff] %v1908
        %1925 = vst [vmem:[#allocation2 + $0x70] sm:$0xff] %v1909
        %1926 = vst [vmem:[#allocation2 + $0x78] sm:$0xff] %v1910
        // Predicated region
        $region49: #{tpu_custom_call.1} parent=31 // pred_check
          %p1927 = pneg %p244
        $region50: #{tpu_custom_call.1} parent=31 // pred_check_branch
          %1929 = sbr.rel (%p1927) target = $region52
        $region51: #{tpu_custom_call.1} parent=31 // pred_region
          %v1930 = vld [vmem:[#allocation2] sm:$0xff]
          %v1931 = vld [vmem:[#allocation2 + $0x8] sm:$0xff]
          %v1932 = vld [vmem:[#allocation2 + $0x10] sm:$0xff]
          %v1933 = vld [vmem:[#allocation2 + $0x18] sm:$0xff]
          %v1934 = vld [vmem:[#allocation2 + $0x20] sm:$0xff]
          %v1935 = vld [vmem:[#allocation2 + $0x28] sm:$0xff]
          %v1936 = vld [vmem:[#allocation2 + $0x30] sm:$0xff]
          %v1937 = vld [vmem:[#allocation2 + $0x38] sm:$0xff]
          %v1938 = vld [vmem:[#allocation2 + $0x40] sm:$0xff]
          %v1939 = vld [vmem:[#allocation2 + $0x48] sm:$0xff]
          %v1940 = vld [vmem:[#allocation2 + $0x50] sm:$0xff]
          %v1941 = vld [vmem:[#allocation2 + $0x58] sm:$0xff]
          %v1942 = vld [vmem:[#allocation2 + $0x60] sm:$0xff]
          %v1943 = vld [vmem:[#allocation2 + $0x68] sm:$0xff]
          %v1944 = vld [vmem:[#allocation2 + $0x70] sm:$0xff]
          %v1945 = vld [vmem:[#allocation2 + $0x78] sm:$0xff]
          %v1946 = vmax.f32 %v1930, 0.0
          %v1947 = vmax.f32 %v1931, 0.0
          %v1948 = vmax.f32 %v1932, 0.0
          %v1949 = vmax.f32 %v1933, 0.0
          %v1950 = vmax.f32 %v1934, 0.0
          %v1951 = vmax.f32 %v1935, 0.0
          %v1952 = vmax.f32 %v1936, 0.0
          %v1953 = vmax.f32 %v1937, 0.0
          %v1954 = vmax.f32 %v1938, 0.0
          %v1955 = vmax.f32 %v1939, 0.0
          %v1956 = vmax.f32 %v1940, 0.0
          %v1957 = vmax.f32 %v1941, 0.0
          %v1958 = vmax.f32 %v1942, 0.0
          %v1959 = vmax.f32 %v1943, 0.0
          %v1960 = vmax.f32 %v1944, 0.0
          %v1961 = vmax.f32 %v1945, 0.0
          %v1962 = vld [vmem:[#allocation8] sm:$0xff]
          %v1963 = vld [vmem:[#allocation8 + $0x8] sm:$0xff]
          %v1964 = vld [vmem:[#allocation8 + $0x10] sm:$0xff]
          %v1965 = vld [vmem:[#allocation8 + $0x18] sm:$0xff]
          %v1966 = vld [vmem:[#allocation8 + $0x20] sm:$0xff]
          %v1967 = vld [vmem:[#allocation8 + $0x28] sm:$0xff]
          %v1968 = vld [vmem:[#allocation8 + $0x30] sm:$0xff]
          %v1969 = vld [vmem:[#allocation8 + $0x38] sm:$0xff]
          %v1970 = vld [vmem:[#allocation8 + $0x40] sm:$0xff]
          %v1971 = vld [vmem:[#allocation8 + $0x48] sm:$0xff]
          %v1972 = vld [vmem:[#allocation8 + $0x50] sm:$0xff]
          %v1973 = vld [vmem:[#allocation8 + $0x58] sm:$0xff]
          %v1974 = vld [vmem:[#allocation8 + $0x60] sm:$0xff]
          %v1975 = vld [vmem:[#allocation8 + $0x68] sm:$0xff]
          %v1976 = vld [vmem:[#allocation8 + $0x70] sm:$0xff]
          %v1977 = vld [vmem:[#allocation8 + $0x78] sm:$0xff]
          %1978 = vmatpush.msra.mxu0 %v1977
          %1979 = vmatpush.msra.mxu0 %v1976
          %1980 = vmatpush.msra.mxu0 %v1975
          %1981 = vmatpush.msra.mxu0 %v1974
          %1982 = vmatpush.msra.mxu0 %v1973
          %1983 = vmatpush.msra.mxu0 %v1972
          %1984 = vmatpush.msra.mxu0 %v1971
          %1985 = vmatpush.msra.mxu0 %v1970
          %1986 = vmatpush.msra.mxu0 %v1969
          %1987 = vmatpush.msra.mxu0 %v1968
          %1988 = vmatpush.msra.mxu0 %v1967
          %1989 = vmatpush.msra.mxu0 %v1966
          %1990 = vmatpush.msra.mxu0 %v1965
          %1991 = vmatpush.msra.mxu0 %v1964
          %1992 = vmatpush.msra.mxu0 %v1963
          %1993 = vmatpush.msra.mxu0 %v1962
          %1994 = vmatmul.f32.gmra.mxu0 %v1946
          %v1995 = vpop.f32.mrf.mxu0
          %v1996 = vadd.f32 0.0, %v1995
          %1997 = vmatmul.f32.gmra.mxu0 %v1947
          %v1998 = vpop.f32.mrf.mxu0
          %v1999 = vadd.f32 0.0, %v1998
          %2000 = vmatmul.f32.gmra.mxu0 %v1948
          %v2001 = vpop.f32.mrf.mxu0
          %v2002 = vadd.f32 0.0, %v2001
          %2003 = vmatmul.f32.gmra.mxu0 %v1949
          %v2004 = vpop.f32.mrf.mxu0
          %v2005 = vadd.f32 0.0, %v2004
          %2006 = vmatmul.f32.gmra.mxu0 %v1950
          %v2007 = vpop.f32.mrf.mxu0
          %v2008 = vadd.f32 0.0, %v2007
          %2009 = vmatmul.f32.gmra.mxu0 %v1951
          %v2010 = vpop.f32.mrf.mxu0
          %v2011 = vadd.f32 0.0, %v2010
          %2012 = vmatmul.f32.gmra.mxu0 %v1952
          %v2013 = vpop.f32.mrf.mxu0
          %v2014 = vadd.f32 0.0, %v2013
          %2015 = vmatmul.f32.gmra.mxu0 %v1953
          %v2016 = vpop.f32.mrf.mxu0
          %v2017 = vadd.f32 0.0, %v2016
          %2018 = vmatmul.f32.gmra.mxu0 %v1954
          %v2019 = vpop.f32.mrf.mxu0
          %v2020 = vadd.f32 0.0, %v2019
          %2021 = vmatmul.f32.gmra.mxu0 %v1955
          %v2022 = vpop.f32.mrf.mxu0
          %v2023 = vadd.f32 0.0, %v2022
          %2024 = vmatmul.f32.gmra.mxu0 %v1956
          %v2025 = vpop.f32.mrf.mxu0
          %v2026 = vadd.f32 0.0, %v2025
          %2027 = vmatmul.f32.gmra.mxu0 %v1957
          %v2028 = vpop.f32.mrf.mxu0
          %v2029 = vadd.f32 0.0, %v2028
          %2030 = vmatmul.f32.gmra.mxu0 %v1958
          %v2031 = vpop.f32.mrf.mxu0
          %v2032 = vadd.f32 0.0, %v2031
          %2033 = vmatmul.f32.gmra.mxu0 %v1959
          %v2034 = vpop.f32.mrf.mxu0
          %v2035 = vadd.f32 0.0, %v2034
          %2036 = vmatmul.f32.gmra.mxu0 %v1960
          %v2037 = vpop.f32.mrf.mxu0
          %v2038 = vadd.f32 0.0, %v2037
          %2039 = vmatmul.f32.gmra.mxu0 %v1961
          %v2040 = vpop.f32.mrf.mxu0
          %v2041 = vadd.f32 0.0, %v2040
          %2042 = vdwg.mxu0
          %v2043 = vmax.f32 %v1996, 0.0
          %v2044 = vmax.f32 %v1999, 0.0
          %v2045 = vmax.f32 %v2002, 0.0
          %v2046 = vmax.f32 %v2005, 0.0
          %v2047 = vmax.f32 %v2008, 0.0
          %v2048 = vmax.f32 %v2011, 0.0
          %v2049 = vmax.f32 %v2014, 0.0
          %v2050 = vmax.f32 %v2017, 0.0
          %v2051 = vmax.f32 %v2020, 0.0
          %v2052 = vmax.f32 %v2023, 0.0
          %v2053 = vmax.f32 %v2026, 0.0
          %v2054 = vmax.f32 %v2029, 0.0
          %v2055 = vmax.f32 %v2032, 0.0
          %v2056 = vmax.f32 %v2035, 0.0
          %v2057 = vmax.f32 %v2038, 0.0
          %v2058 = vmax.f32 %v2041, 0.0
          %2059 = vst [vmem:[%s240] sm:$0xff] %v2043
          %2060 = vst [vmem:[%s240 + $0x8] sm:$0xff] %v2044
          %2061 = vst [vmem:[%s240 + $0x10] sm:$0xff] %v2045
          %2062 = vst [vmem:[%s240 + $0x18] sm:$0xff] %v2046
          %2063 = vst [vmem:[%s240 + $0x20] sm:$0xff] %v2047
          %2064 = vst [vmem:[%s240 + $0x28] sm:$0xff] %v2048
          %2065 = vst [vmem:[%s240 + $0x30] sm:$0xff] %v2049
          %2066 = vst [vmem:[%s240 + $0x38] sm:$0xff] %v2050
          %2067 = vst [vmem:[%s240 + $0x40] sm:$0xff] %v2051
          %2068 = vst [vmem:[%s240 + $0x48] sm:$0xff] %v2052
          %2069 = vst [vmem:[%s240 + $0x50] sm:$0xff] %v2053
          %2070 = vst [vmem:[%s240 + $0x58] sm:$0xff] %v2054
          %2071 = vst [vmem:[%s240 + $0x60] sm:$0xff] %v2055
          %2072 = vst [vmem:[%s240 + $0x68] sm:$0xff] %v2056
          %2073 = vst [vmem:[%s240 + $0x70] sm:$0xff] %v2057
          %2074 = vst [vmem:[%s240 + $0x78] sm:$0xff] %v2058
        $region52: #{tpu_custom_call.1} parent=31 // pred_fallthru
          _
        %s2075 = sand.u32 %s111, 1
        %s2076 = scalar_lea.sflag [#allocation5], %s2075
        %s2077 = sand.u32 %s111, 1
        %s2078 = smul.addr %s2077, 128
        %s2079 = scalar_lea.vmem [#allocation9], %s2078
        // Predicated region
        $region53: #{tpu_custom_call.1} parent=31 // pred_check
          %p2080 = pneg %p121
        $region54: #{tpu_custom_call.1} parent=31 // pred_check_branch
          %2082 = sbr.rel (%p2080) target = $region56
        $region55: #{tpu_custom_call.1} parent=31 // pred_region
          %s2083 = smul.u32 16, %s25
          %2085 = vsyncadd %s2076, 0
          %s2086 = smul.addr %s2083, 8
          %s2087 = scalar_lea.hbm %s3, %s2086
          %s2088 = sshll.u32 %s2079, 4
          %s2089 = int_to_ptr.vmem [resolvable:$true] %s2088
          %s2090 = sshll.u32 %s2087, 4
          %s2091 = int_to_ptr.hbm [resolvable:$true] %s2090
          %2096 = dma.vmem_to_hbm [thread:$0]  %s2089, 2048, %s2091, %s2076, 128, 128, 8
        $region56: #{tpu_custom_call.1} parent=31 // pred_fallthru
          _
      $region32: #{tpu_custom_call.1} parent=5 // pred_fallthru
        _
      %p2097 = scmp.le.s32.totalorder 2, %s16
      // Predicated region
      $region57: #{tpu_custom_call.1} parent=5 // pred_check
        %p2098 = pneg %p2097
      $region58: #{tpu_custom_call.1} parent=5 // pred_check_branch
        %2100 = sbr.rel (%p2098) target = $region60
      $region59: #{tpu_custom_call.1} parent=5 // pred_region
        %s2101 = ssub.s32 %s16, 2
        // Predicated region
        $region61: #{tpu_custom_call.1} parent=59 // pred_check
          %p2102 = pneg %p127
        $region62: #{tpu_custom_call.1} parent=59 // pred_check_branch
          %2104 = sbr.rel (%p2102) target = $region64
        $region63: #{tpu_custom_call.1} parent=59 // pred_region
          %s2105 = sand.u32 %s112, 1
          %s2106 = scalar_lea.sflag [#allocation5], %s2105
          %s2107 = sand.u32 %s112, 1
          %s2108 = smul.addr %s2107, 128
          %s2109 = scalar_lea.vmem [#allocation9], %s2108
          %2111 = dma.done %s2106, 2048
        $region64: #{tpu_custom_call.1} parent=59 // pred_fallthru
          _
      $region60: #{tpu_custom_call.1} parent=5 // pred_fallthru
        _
    $region6: #{tpu_custom_call.1} parent=1 // loop_footer
      %s20 = sadd.s32 1, %s16
    $region7: #{tpu_custom_call.1} parent=1 // loop_footer_branch
      %15 = sbr.rel target = $region3
    $region8: #{tpu_custom_call.1} parent=1 // loop_exit
      _
    %2112 = vsyncpa [#allocation4], 1
    %s2113 = scalar_lea.sflag [#allocation4], 1
    %2114 = vsyncpa %s2113, 1
    %2115 = vsyncpa [#allocation7], 1
    %2116 = vsyncpa [#allocation5], 1
    %s2117 = scalar_lea.sflag [#allocation5], 1
    %2118 = vsyncpa %s2117, 1

</llo_original>
